<compile_context>
chip_gen: v7x
topology: tpu7x:2x2x1
jax: 0.10.0
libtpu: 0.0.40
codegen_flags: <defaults>
</compile_context>

<pallas_src>
import functools

import jax
import jax.numpy as jnp
from jax.experimental import pallas as pl
from jax.experimental.pallas import tpu as pltpu

LANES = 128


def _r8(n):
    return ((n + 7) // 8) * 8


# ---------------------------------------------------------------------------
# Kernel: one graph per grid step; weights/biases VMEM-resident.
# ---------------------------------------------------------------------------
def _critic_gcn_kernel(act_ref, w_ref, b_ref, out_ref, stk_ref, *,
                       n_nodes, rn, re_, r_nodes, r_edge, r_p, r_anorm, r_misc):
    def dot(a, b):
        return jnp.dot(a, b, preferred_element_type=jnp.float32)

    def w(k):                                   # static 128-row slice (zero cost)
        return w_ref[k * LANES:(k + 1) * LANES, :]

    def bias(k):
        return b_ref[k:k + 1, :]

    relu = lambda v: jnp.maximum(v, 0.0)

    # --- edge MLP (full-lane [RE,128] x [128,128] matmuls) --------------------
    edge_attr = act_ref[r_edge:r_edge + re_, :]               # [RE,128] (16 real lanes)
    e = relu(dot(edge_attr, w(0)) + bias(0))                  # edge_fc1
    e = relu(dot(e, w(1)) + bias(1))                          # edge_fc2 (30 real lanes)

    # --- stack [nodes ; e ; 0] into the 128-row scratch so every graph
    #     aggregation is an unmasked [RN,128] x [128,128] MXU op --------------
    stk_ref[0:rn, :] = act_ref[r_nodes:r_nodes + rn, :]
    stk_ref[rn:rn + re_, :] = e
    stk_ref[rn + re_:, :] = jnp.zeros((LANES - rn - re_, LANES), jnp.float32)

    # --- GCNConv1:  A@(nodes + S@e)@W1  ==  [A | A@S] @ [nodes ; e] @ W1 ------
    p_op = act_ref[r_p:r_p + rn, :]                           # [RN,128]
    x = relu(dot(dot(p_op, stk_ref[...]), w(2)) + bias(2))    # [RN,128]

    # --- GCNConv2 -------------------------------------------------------------
    stk_ref[0:rn, :] = x
    a1 = act_ref[r_anorm:r_anorm + rn, :]                     # [RN,128] (A_norm, padded lanes zero)
    x = relu(dot(dot(a1, stk_ref[...]), w(3)) + bias(3))      # [RN,128] (64 real lanes)

    # --- global_mean_pool over real node rows (VPU mask + XLU sublane reduce) -
    row = jax.lax.broadcasted_iota(jnp.int32, (rn, LANES), 0)
    g = jnp.sum(jnp.where(row < n_nodes, x, 0.0), axis=0, keepdims=True)
    g = g * (1.0 / n_nodes)                                   # [1,128]

    # --- fused state/action head + q_fc1 on MXU, q_out on the VPU -------------
    sa = relu(dot(g + act_ref[r_misc:r_misc + 1, :], w(4)) + bias(4))  # [s | a]
    q = relu(dot(sa, w(5)) + bias(5))                         # [1,128] (64 real lanes)
    q_row = jnp.sum(q * b_ref[6:7, :], axis=-1, keepdims=True) + b_ref[7:8, :]
    out_ref[...] = jnp.broadcast_to(q_row, (8, LANES))        # lane-dense; Q in every slot


def critic_gcn_pallas(act_slab, w_slab, b_slab, *, n_nodes, rn, re_, offsets):
    batch, rows, lanes = act_slab.shape
    assert lanes == LANES
    kernel = functools.partial(_critic_gcn_kernel, n_nodes=n_nodes, rn=rn,
                               re_=re_, **offsets)
    flops = int(2 * LANES * LANES * (2 * re_ + 4 * rn + 2) * batch)
    bytes_accessed = int((act_slab.size + w_slab.size + b_slab.size) * 4
                         + batch * 8 * LANES * 4)
    out = pl.pallas_call(
        kernel,
        out_shape=jax.ShapeDtypeStruct((batch, 8, LANES), jnp.float32),
        grid_spec=pltpu.PrefetchScalarGridSpec(
            num_scalar_prefetch=0,
            grid=(batch,),
            in_specs=[
                # per-graph activation/graph-operator block
                pl.BlockSpec((None, rows, LANES), lambda b: (b, 0, 0)),
                # weights + biases: constant index -> fetched once, VMEM-resident
                pl.BlockSpec(w_slab.shape, lambda b: (0, 0)),
                pl.BlockSpec(b_slab.shape, lambda b: (0, 0)),
            ],
            out_specs=pl.BlockSpec((None, 8, LANES), lambda b: (b, 0, 0)),
            scratch_shapes=[pltpu.VMEM((LANES, LANES), jnp.float32)],
        ),
        compiler_params=pltpu.CompilerParams(
            dimension_semantics=("parallel",)),
        cost_estimate=pl.CostEstimate(flops=flops, transcendentals=0,
                                      bytes_accessed=bytes_accessed),
    )(act_slab, w_slab, b_slab)
    return out[:, 0, :1]                                      # [B, 1]


# ---------------------------------------------------------------------------
# Wrapper glue: params, dense graph operators, slab packing, reference.
# ---------------------------------------------------------------------------
def make_params(key, node_input_dim, edge_input_dim, action_dim, hidden_dim):
    def lin(key, fan_in, fan_out):
        k1, k2 = jax.random.split(key)
        bound = 1.0 / jnp.sqrt(fan_in)
        w = jax.random.uniform(k1, (fan_in, fan_out), jnp.float32, -bound, bound)
        b = jax.random.uniform(k2, (1, fan_out), jnp.float32, -bound, bound)
        return w, b

    keys = jax.random.split(key, 8)
    p = {}
    p["we1"], p["be1"] = lin(keys[0], edge_input_dim, hidden_dim)    # edge_fc1
    p["we2"], p["be2"] = lin(keys[1], hidden_dim, 30)                # edge_fc2
    p["wg1"], p["bg1"] = lin(keys[2], node_input_dim, hidden_dim)    # gcn1.lin
    p["wg2"], p["bg2"] = lin(keys[3], hidden_dim, hidden_dim // 2)   # gcn2.lin
    p["ws"], p["bs"] = lin(keys[4], hidden_dim // 2, 64)             # state_fc
    p["wa"], p["ba"] = lin(keys[5], action_dim, 64)                  # action_fc
    p["wq1"], p["bq1"] = lin(keys[6], 128, 64)                       # q_fc1
    p["wq2"], p["bq2"] = lin(keys[7], 64, 1)                         # q_out
    return p


def build_graph_operators(edge_index, num_nodes):
    """Dense scatter-mean matrix and GCN-normalized adjacency (self loops).

    Wrapper-fidelity note: +I is added unconditionally and duplicate edges
    accumulate; matches the reference below, may differ from PyG on graphs that
    already contain self loops.
    """
    src, dst = edge_index[0], edge_index[1]
    onehot_src = (src[None, :] == jnp.arange(num_nodes)[:, None]).astype(jnp.float32)
    counts = onehot_src.sum(axis=1, keepdims=True)
    s_mean = onehot_src / jnp.maximum(counts, 1.0)               # [N, E]

    a_hat = jnp.zeros((num_nodes, num_nodes), jnp.float32).at[dst, src].add(1.0)
    a_hat = a_hat + jnp.eye(num_nodes, dtype=jnp.float32)
    deg = a_hat.sum(axis=1)
    d_inv_sqrt = jnp.where(deg > 0, 1.0 / jnp.sqrt(deg), 0.0)
    a_norm = d_inv_sqrt[:, None] * a_hat * d_inv_sqrt[None, :]   # [N, N]
    return s_mean, a_norm


def pack_weights(p, *, action_dim, hidden_dim, node_input_dim):
    """Pack all weights/biases once (hoisted out of the per-call path)."""
    assert hidden_dim == LANES, "layout assumes hidden_dim == 128"
    hd2 = hidden_dim // 2
    # Fused block-diagonal state/action head invariants (see review):
    assert hd2 == 64 and action_dim <= 64
    assert p["ws"].shape == (hd2, 64) and p["wa"].shape == (action_dim, 64)
    assert p["wq1"].shape == (128, 64) and p["wq2"].shape == (64, 1)
    assert p["we2"].shape[1] == node_input_dim == 30

    def tile(wt):
        out = jnp.zeros((LANES, LANES), jnp.float32)
        return out.at[:wt.shape[0], :wt.shape[1]].set(wt)

    w_sa = jnp.zeros((LANES, LANES), jnp.float32)                # block-diag [ws | wa]
    w_sa = w_sa.at[:hd2, :64].set(p["ws"])
    w_sa = w_sa.at[hd2:hd2 + action_dim, 64:128].set(p["wa"])

    w_slab = jnp.concatenate(
        [tile(p["we1"]), tile(p["we2"]), tile(p["wg1"]), tile(p["wg2"]),
         w_sa, tile(p["wq1"])], axis=0)                          # [768, 128]

    def brow(b_):
        out = jnp.zeros((1, LANES), jnp.float32)
        return out.at[:, :b_.shape[1]].set(b_)

    b_sa = jnp.concatenate([p["bs"], p["ba"]], axis=1)           # [1, 128]
    wq2_row = jnp.zeros((1, LANES), jnp.float32).at[:, :64].set(p["wq2"][:, 0][None, :])
    bq2_row = jnp.full((1, LANES), p["bq2"][0, 0], jnp.float32)
    b_slab = jnp.concatenate(
        [brow(p["be1"]), brow(p["be2"]), brow(p["bg1"]), brow(p["bg2"]),
         brow(b_sa), brow(p["bq1"]), wq2_row, bq2_row], axis=0)  # [8, 128]
    return w_slab, b_slab


def pack_graph_batch(nodes_b, edge_attr_b, action_b, edge_index_b, *,
                     num_nodes, num_edges, action_dim):
    """Per-call packing of B graphs into a [B, rows, 128] lane-dense slab."""
    batch = nodes_b.shape[0]
    rn, re_ = _r8(num_nodes), _r8(num_edges)
    assert rn + re_ <= LANES, "stacking trick needs padded nodes+edges <= 128"
    r_nodes, r_edge = 0, rn
    r_p = rn + re_
    r_anorm = r_p + rn
    r_misc = r_anorm + rn
    rows = r_misc + 8
    offsets = dict(r_nodes=r_nodes, r_edge=r_edge, r_p=r_p,
                   r_anorm=r_anorm, r_misc=r_misc)

    node_dim = nodes_b.shape[-1]
    edge_dim = edge_attr_b.shape[-1]
    blocks = []
    for g in range(batch):
        s_mean, a_norm = build_graph_operators(edge_index_b[g], num_nodes)
        a_s = a_norm @ s_mean                                    # [N, E]
        blk = jnp.zeros((rows, LANES), jnp.float32)
        blk = blk.at[r_nodes:r_nodes + num_nodes, :node_dim].set(nodes_b[g])
        blk = blk.at[r_edge:r_edge + num_edges, :edge_dim].set(edge_attr_b[g])
        # combined operator  P = [A_norm (lanes 0..rn) | A_norm@S (lanes rn..rn+E)]
        blk = blk.at[r_p:r_p + num_nodes, :num_nodes].set(a_norm)
        blk = blk.at[r_p:r_p + num_nodes, rn:rn + num_edges].set(a_s)
        blk = blk.at[r_anorm:r_anorm + num_nodes, :num_nodes].set(a_norm)
        blk = blk.at[r_misc, 64:64 + action_dim].set(action_b[g, 0])
        blocks.append(blk)
    return jnp.stack(blocks), offsets, rn, re_


def reference_forward(nodes, edge_attr, action_attr, s_mean, a_norm, p):
    """Pure-JAX reference matching the PyTorch forward exactly."""
    relu = lambda v: jnp.maximum(v, 0.0)
    e = relu(edge_attr @ p["we1"] + p["be1"])
    e = relu(e @ p["we2"] + p["be2"])
    x = nodes + s_mean @ e
    x = relu(a_norm @ (x @ p["wg1"]) + p["bg1"])
    x = relu(a_norm @ (x @ p["wg2"]) + p["bg2"])
    g = jnp.mean(x, axis=0, keepdims=True)
    s = relu(g @ p["ws"] + p["bs"])
    a = relu(action_attr @ p["wa"] + p["ba"])
    q = relu(jnp.concatenate([s, a], axis=-1) @ p["wq1"] + p["bq1"])
    return q @ p["wq2"] + p["bq2"]


if __name__ == "__main__":
    # node_input_dim must be 30 (nodes + edge_aggregated add in the model).
    node_input_dim, edge_input_dim, action_dim, hidden_dim = 30, 16, 8, 128
    num_nodes, num_edges, batch = 12, 24, 8

    key = jax.random.PRNGKey(0)
    k_n, k_e, k_a, k_ei, k_p = jax.random.split(key, 5)
    nodes_b = jax.random.normal(k_n, (batch, num_nodes, node_input_dim), jnp.float32)
    edge_b = jax.random.normal(k_e, (batch, num_edges, edge_input_dim), jnp.float32)
    action_b = jax.random.normal(k_a, (batch, 1, action_dim), jnp.float32)

    k_src, k_dst = jax.random.split(k_ei)
    src = jax.random.randint(k_src, (batch, num_edges), 0, num_nodes, jnp.int32)
    dst = jax.random.randint(k_dst, (batch, num_edges), 0, num_nodes, jnp.int32)
    dst = jnp.where(dst == src, (dst + 1) % num_nodes, dst)     # avoid self loops
    edge_index_b = jnp.stack([src, dst], axis=1)                # [B, 2, E]

    params = make_params(k_p, node_input_dim, edge_input_dim, action_dim, hidden_dim)

    # Weights packed ONCE (persistent device arrays); only acts repacked per call.
    w_slab, b_slab = pack_weights(params, action_dim=action_dim,
                                  hidden_dim=hidden_dim,
                                  node_input_dim=node_input_dim)
    act_slab, offsets, rn, re_ = pack_graph_batch(
        nodes_b, edge_b, action_b, edge_index_b,
        num_nodes=num_nodes, num_edges=num_edges, action_dim=action_dim)

    q_kernel = jax.block_until_ready(
        critic_gcn_pallas(act_slab, w_slab, b_slab,
                          n_nodes=num_nodes, rn=rn, re_=re_, offsets=offsets))

    refs = []
    for g in range(batch):
        s_mean, a_norm = build_graph_operators(edge_index_b[g], num_nodes)
        refs.append(reference_forward(nodes_b[g], edge_b[g], action_b[g],
                                      s_mean, a_norm, params))
    q_ref = jnp.concatenate(refs, axis=0)                       # [B, 1]

    assert q_kernel.shape == (batch, 1)
    assert jnp.allclose(q_kernel, q_ref, atol=1e-3, rtol=1e-3), (q_kernel, q_ref)
    print("KERNEL_OK")
</pallas_src>

<mosaic_0001>
module attributes {stable_mosaic.version = 11 : i64} {
  func.func @_critic_gcn_kernel(%arg0: i32, %arg1: memref<1x80x128xf32, #tpu.memory_space<vmem>>, %arg2: memref<768x128xf32, #tpu.memory_space<vmem>>, %arg3: memref<8x128xf32, #tpu.memory_space<vmem>>, %arg4: memref<1x8x128xf32, #tpu.memory_space<vmem>>, %arg5: memref<128x128xf32, #tpu.memory_space<vmem>>) attributes {dimension_semantics = [#tpu.dimension_semantics<parallel>], iteration_bounds = array<i64: 8>, scalar_prefetch = 0 : i64, scratch_operands = 1 : i64, tpu.core_type = #tpu.core_type<tc>, window_params = [{transform_indices = @transform_0, window_bounds = array<i64: 1, 80, 128>}, {pipeline_mode = #tpu.pipeline_mode<synchronous>, transform_indices = @transform_1, window_bounds = array<i64: 768, 128>}, {pipeline_mode = #tpu.pipeline_mode<synchronous>, transform_indices = @transform_2, window_bounds = array<i64: 8, 128>}, {transform_indices = @transform_3, window_bounds = array<i64: 1, 8, 128>}]} {
    %c0 = arith.constant 0 : index
    %c16 = arith.constant 16 : index
    %c0_0 = arith.constant 0 : index
    %0 = vector.load %arg1[%c0, %c16, %c0_0] : memref<1x80x128xf32, #tpu.memory_space<vmem>>, vector<1x24x128xf32>
    %1 = vector.shape_cast %0 : vector<1x24x128xf32> to vector<24x128xf32>
    %c0_1 = arith.constant 0 : index
    %c0_2 = arith.constant 0 : index
    %2 = vector.load %arg2[%c0_1, %c0_2] : memref<768x128xf32, #tpu.memory_space<vmem>>, vector<128x128xf32>
    %cst = arith.constant dense<0.000000e+00> : vector<24x128xf32>
    %3 = tpu.matmul %1, %2, %cst {dimension_numbers = #tpu.dot_dimension_numbers<[1], [0], [0], [1], [0, 0, 1, 1], [], []>} : vector<24x128xf32>, vector<128x128xf32>, vector<24x128xf32> -> vector<24x128xf32>
    %c0_3 = arith.constant 0 : index
    %c0_4 = arith.constant 0 : index
    %4 = vector.load %arg3[%c0_3, %c0_4] : memref<8x128xf32, #tpu.memory_space<vmem>>, vector<1x128xf32>
    %5 = vector.broadcast %4 : vector<1x128xf32> to vector<24x128xf32>
    %6 = arith.addf %3, %5 : vector<24x128xf32>
    %cst_5 = arith.constant 0.000000e+00 : f32
    %7 = vector.broadcast %cst_5 : f32 to vector<24x128xf32>
    %8 = arith.maximumf %6, %7 : vector<24x128xf32>
    %c128 = arith.constant 128 : index
    %c0_6 = arith.constant 0 : index
    %9 = vector.load %arg2[%c128, %c0_6] : memref<768x128xf32, #tpu.memory_space<vmem>>, vector<128x128xf32>
    %cst_7 = arith.constant dense<0.000000e+00> : vector<24x128xf32>
    %10 = tpu.matmul %8, %9, %cst_7 {dimension_numbers = #tpu.dot_dimension_numbers<[1], [0], [0], [1], [0, 0, 1, 1], [], []>} : vector<24x128xf32>, vector<128x128xf32>, vector<24x128xf32> -> vector<24x128xf32>
    %c1 = arith.constant 1 : index
    %c0_8 = arith.constant 0 : index
    %11 = vector.load %arg3[%c1, %c0_8] : memref<8x128xf32, #tpu.memory_space<vmem>>, vector<1x128xf32>
    %12 = vector.broadcast %11 : vector<1x128xf32> to vector<24x128xf32>
    %13 = arith.addf %10, %12 : vector<24x128xf32>
    %cst_9 = arith.constant 0.000000e+00 : f32
    %14 = vector.broadcast %cst_9 : f32 to vector<24x128xf32>
    %15 = arith.maximumf %13, %14 : vector<24x128xf32>
    %c0_10 = arith.constant 0 : index
    %c0_11 = arith.constant 0 : index
    %c0_12 = arith.constant 0 : index
    %16 = vector.load %arg1[%c0_10, %c0_11, %c0_12] : memref<1x80x128xf32, #tpu.memory_space<vmem>>, vector<1x16x128xf32>
    %17 = vector.shape_cast %16 : vector<1x16x128xf32> to vector<16x128xf32>
    %c0_13 = arith.constant 0 : index
    %c0_14 = arith.constant 0 : index
    %18 = vector.load %arg5[%c0_13, %c0_14] : memref<128x128xf32, #tpu.memory_space<vmem>>, vector<16x128xf32>
    tpu.vector_store %arg5[%c0_13, %c0_14], %17 {strides = array<i32>} : memref<128x128xf32, #tpu.memory_space<vmem>>, vector<16x128xf32>,
    %c16_15 = arith.constant 16 : index
    %c0_16 = arith.constant 0 : index
    %19 = vector.load %arg5[%c16_15, %c0_16] : memref<128x128xf32, #tpu.memory_space<vmem>>, vector<24x128xf32>
    tpu.vector_store %arg5[%c16_15, %c0_16], %15 {strides = array<i32>} : memref<128x128xf32, #tpu.memory_space<vmem>>, vector<24x128xf32>,
    %cst_17 = arith.constant 0.000000e+00 : f32
    %20 = vector.broadcast %cst_17 : f32 to vector<88x128xf32>
    %c40 = arith.constant 40 : index
    %c0_18 = arith.constant 0 : index
    %21 = vector.load %arg5[%c40, %c0_18] : memref<128x128xf32, #tpu.memory_space<vmem>>, vector<88x128xf32>
    tpu.vector_store %arg5[%c40, %c0_18], %20 {strides = array<i32>} : memref<128x128xf32, #tpu.memory_space<vmem>>, vector<88x128xf32>,
    %c0_19 = arith.constant 0 : index
    %c40_20 = arith.constant 40 : index
    %c0_21 = arith.constant 0 : index
    %22 = vector.load %arg1[%c0_19, %c40_20, %c0_21] : memref<1x80x128xf32, #tpu.memory_space<vmem>>, vector<1x16x128xf32>
    %23 = vector.shape_cast %22 : vector<1x16x128xf32> to vector<16x128xf32>
    %c0_22 = arith.constant 0 : index
    %c0_23 = arith.constant 0 : index
    %24 = vector.load %arg5[%c0_22, %c0_23] : memref<128x128xf32, #tpu.memory_space<vmem>>, vector<128x128xf32>
    %cst_24 = arith.constant dense<0.000000e+00> : vector<16x128xf32>
    %25 = tpu.matmul %23, %24, %cst_24 {dimension_numbers = #tpu.dot_dimension_numbers<[1], [0], [0], [1], [0, 0, 1, 1], [], []>} : vector<16x128xf32>, vector<128x128xf32>, vector<16x128xf32> -> vector<16x128xf32>
    %c256 = arith.constant 256 : index
    %c0_25 = arith.constant 0 : index
    %26 = vector.load %arg2[%c256, %c0_25] : memref<768x128xf32, #tpu.memory_space<vmem>>, vector<128x128xf32>
    %cst_26 = arith.constant dense<0.000000e+00> : vector<16x128xf32>
    %27 = tpu.matmul %25, %26, %cst_26 {dimension_numbers = #tpu.dot_dimension_numbers<[1], [0], [0], [1], [0, 0, 1, 1], [], []>} : vector<16x128xf32>, vector<128x128xf32>, vector<16x128xf32> -> vector<16x128xf32>
    %c2 = arith.constant 2 : index
    %c0_27 = arith.constant 0 : index
    %28 = vector.load %arg3[%c2, %c0_27] : memref<8x128xf32, #tpu.memory_space<vmem>>, vector<1x128xf32>
    %29 = vector.broadcast %28 : vector<1x128xf32> to vector<16x128xf32>
    %30 = arith.addf %27, %29 : vector<16x128xf32>
    %cst_28 = arith.constant 0.000000e+00 : f32
    %31 = vector.broadcast %cst_28 : f32 to vector<16x128xf32>
    %32 = arith.maximumf %30, %31 : vector<16x128xf32>
    %c0_29 = arith.constant 0 : index
    %c0_30 = arith.constant 0 : index
    %33 = vector.load %arg5[%c0_29, %c0_30] : memref<128x128xf32, #tpu.memory_space<vmem>>, vector<16x128xf32>
    tpu.vector_store %arg5[%c0_29, %c0_30], %32 {strides = array<i32>} : memref<128x128xf32, #tpu.memory_space<vmem>>, vector<16x128xf32>,
    %c0_31 = arith.constant 0 : index
    %c56 = arith.constant 56 : index
    %c0_32 = arith.constant 0 : index
    %34 = vector.load %arg1[%c0_31, %c56, %c0_32] : memref<1x80x128xf32, #tpu.memory_space<vmem>>, vector<1x16x128xf32>
    %35 = vector.shape_cast %34 : vector<1x16x128xf32> to vector<16x128xf32>
    %c0_33 = arith.constant 0 : index
    %c0_34 = arith.constant 0 : index
    %36 = vector.load %arg5[%c0_33, %c0_34] : memref<128x128xf32, #tpu.memory_space<vmem>>, vector<128x128xf32>
    %cst_35 = arith.constant dense<0.000000e+00> : vector<16x128xf32>
    %37 = tpu.matmul %35, %36, %cst_35 {dimension_numbers = #tpu.dot_dimension_numbers<[1], [0], [0], [1], [0, 0, 1, 1], [], []>} : vector<16x128xf32>, vector<128x128xf32>, vector<16x128xf32> -> vector<16x128xf32>
    %c384 = arith.constant 384 : index
    %c0_36 = arith.constant 0 : index
    %38 = vector.load %arg2[%c384, %c0_36] : memref<768x128xf32, #tpu.memory_space<vmem>>, vector<128x128xf32>
    %cst_37 = arith.constant dense<0.000000e+00> : vector<16x128xf32>
    %39 = tpu.matmul %37, %38, %cst_37 {dimension_numbers = #tpu.dot_dimension_numbers<[1], [0], [0], [1], [0, 0, 1, 1], [], []>} : vector<16x128xf32>, vector<128x128xf32>, vector<16x128xf32> -> vector<16x128xf32>
    %c3 = arith.constant 3 : index
    %c0_38 = arith.constant 0 : index
    %40 = vector.load %arg3[%c3, %c0_38] : memref<8x128xf32, #tpu.memory_space<vmem>>, vector<1x128xf32>
    %41 = vector.broadcast %40 : vector<1x128xf32> to vector<16x128xf32>
    %42 = arith.addf %39, %41 : vector<16x128xf32>
    %cst_39 = arith.constant 0.000000e+00 : f32
    %43 = vector.broadcast %cst_39 : f32 to vector<16x128xf32>
    %44 = arith.maximumf %42, %43 : vector<16x128xf32>
    %45 = tpu.iota {dimensions = array<i32: 0>} : vector<16x128xi32>
    %c12_i32 = arith.constant 12 : i32
    %46 = vector.broadcast %c12_i32 : i32 to vector<16x128xi32>
    %47 = arith.cmpi slt, %45, %46 : vector<16x128xi32>
    %cst_40 = arith.constant 0.000000e+00 : f32
    %48 = vector.broadcast %cst_40 : f32 to vector<16x128xf32>
    %49 = arith.select %47, %44, %48 : vector<16x128xi1>, vector<16x128xf32>
    %cst_41 = arith.constant dense<0.000000e+00> : vector<128xf32>
    %50 = vector.multi_reduction <add>, %49, %cst_41 [0] : vector<16x128xf32> to vector<128xf32>
    %51 = vector.shape_cast %50 : vector<128xf32> to vector<1x128xf32>
    %cst_42 = arith.constant 0.0833333358 : f32
    %52 = vector.broadcast %cst_42 : f32 to vector<1x128xf32>
    %53 = arith.mulf %51, %52 : vector<1x128xf32>
    %c0_43 = arith.constant 0 : index
    %c72 = arith.constant 72 : index
    %c0_44 = arith.constant 0 : index
    %54 = vector.load %arg1[%c0_43, %c72, %c0_44] : memref<1x80x128xf32, #tpu.memory_space<vmem>>, vector<1x1x128xf32>
    %55 = vector.shape_cast %54 : vector<1x1x128xf32> to vector<1x128xf32>
    %56 = arith.addf %53, %55 : vector<1x128xf32>
    %c512 = arith.constant 512 : index
    %c0_45 = arith.constant 0 : index
    %57 = vector.load %arg2[%c512, %c0_45] : memref<768x128xf32, #tpu.memory_space<vmem>>, vector<128x128xf32>
    %cst_46 = arith.constant dense<0.000000e+00> : vector<1x128xf32>
    %58 = tpu.matmul %56, %57, %cst_46 {dimension_numbers = #tpu.dot_dimension_numbers<[1], [0], [0], [1], [0, 0, 1, 1], [], []>} : vector<1x128xf32>, vector<128x128xf32>, vector<1x128xf32> -> vector<1x128xf32>
    %c4 = arith.constant 4 : index
    %c0_47 = arith.constant 0 : index
    %59 = vector.load %arg3[%c4, %c0_47] : memref<8x128xf32, #tpu.memory_space<vmem>>, vector<1x128xf32>
    %60 = arith.addf %58, %59 : vector<1x128xf32>
    %cst_48 = arith.constant 0.000000e+00 : f32
    %61 = vector.broadcast %cst_48 : f32 to vector<1x128xf32>
    %62 = arith.maximumf %60, %61 : vector<1x128xf32>
    %c640 = arith.constant 640 : index
    %c0_49 = arith.constant 0 : index
    %63 = vector.load %arg2[%c640, %c0_49] : memref<768x128xf32, #tpu.memory_space<vmem>>, vector<128x128xf32>
    %cst_50 = arith.constant dense<0.000000e+00> : vector<1x128xf32>
    %64 = tpu.matmul %62, %63, %cst_50 {dimension_numbers = #tpu.dot_dimension_numbers<[1], [0], [0], [1], [0, 0, 1, 1], [], []>} : vector<1x128xf32>, vector<128x128xf32>, vector<1x128xf32> -> vector<1x128xf32>
    %c5 = arith.constant 5 : index
    %c0_51 = arith.constant 0 : index
    %65 = vector.load %arg3[%c5, %c0_51] : memref<8x128xf32, #tpu.memory_space<vmem>>, vector<1x128xf32>
    %66 = arith.addf %64, %65 : vector<1x128xf32>
    %cst_52 = arith.constant 0.000000e+00 : f32
    %67 = vector.broadcast %cst_52 : f32 to vector<1x128xf32>
    %68 = arith.maximumf %66, %67 : vector<1x128xf32>
    %c6 = arith.constant 6 : index
    %c0_53 = arith.constant 0 : index
    %69 = vector.load %arg3[%c6, %c0_53] : memref<8x128xf32, #tpu.memory_space<vmem>>, vector<1x128xf32>
    %70 = arith.mulf %68, %69 : vector<1x128xf32>
    %cst_54 = arith.constant dense<0.000000e+00> : vector<1xf32>
    %71 = vector.multi_reduction <add>, %70, %cst_54 [1] : vector<1x128xf32> to vector<1xf32>
    %72 = vector.shape_cast %71 : vector<1xf32> to vector<1x1xf32>
    %c7 = arith.constant 7 : index
    %c0_55 = arith.constant 0 : index
    %73 = vector.load %arg3[%c7, %c0_55] : memref<8x128xf32, #tpu.memory_space<vmem>>, vector<1x128xf32>
    %74 = vector.broadcast %72 : vector<1x1xf32> to vector<1x128xf32>
    %75 = arith.addf %74, %73 : vector<1x128xf32>
    %76 = vector.shape_cast %75 : vector<1x128xf32> to vector<1x128xf32>
    %77 = vector.broadcast %76 : vector<1x128xf32> to vector<8x128xf32>
    %c0_56 = arith.constant 0 : index
    %c0_57 = arith.constant 0 : index
    %c0_58 = arith.constant 0 : index
    %78 = vector.load %arg4[%c0_56, %c0_57, %c0_58] : memref<1x8x128xf32, #tpu.memory_space<vmem>>, vector<1x8x128xf32>
    %79 = vector.shape_cast %78 : vector<1x8x128xf32> to vector<8x128xf32>
    %80 = vector.shape_cast %77 : vector<8x128xf32> to vector<1x8x128xf32>
    tpu.vector_store %arg4[%c0_56, %c0_57, %c0_58], %80 {strides = array<i32>} : memref<1x8x128xf32, #tpu.memory_space<vmem>>, vector<1x8x128xf32>,
    return
  }
  func.func @transform_0(%arg0: i32) -> (i32, i32, i32) {
    %c0_i32 = arith.constant 0 : i32
    %c0_i32_0 = arith.constant 0 : i32
    %c0_i32_1 = arith.constant 0 : i32
    return %arg0, %c0_i32, %c0_i32_0 : i32, i32, i32
  }
  func.func @transform_1(%arg0: i32) -> (i32, i32) {
    %c0_i32 = arith.constant 0 : i32
    %c0_i32_0 = arith.constant 0 : i32
    %c0_i32_1 = arith.constant 0 : i32
    return %c0_i32, %c0_i32_0 : i32, i32
  }
  func.func @transform_2(%arg0: i32) -> (i32, i32) {
    %c0_i32 = arith.constant 0 : i32
    %c0_i32_0 = arith.constant 0 : i32
    %c0_i32_1 = arith.constant 0 : i32
    return %c0_i32, %c0_i32_0 : i32, i32
  }
  func.func @transform_3(%arg0: i32) -> (i32, i32, i32) {
    %c0_i32 = arith.constant 0 : i32
    %c0_i32_0 = arith.constant 0 : i32
    %c0_i32_1 = arith.constant 0 : i32
    return %arg0, %c0_i32, %c0_i32_0 : i32, i32, i32
  }
}

</mosaic_0001>

<llo_original>
// kernel: tpu_custom_call.1
$region0: #{tpu_custom_call.1}
  #allocation0 [shape = 'u32[]', space=smem, size = 0x4, offset = 0x4, fixed_abs, tag = 'smem constant byte address 0x4 - core index']
  #allocation1 [shape = 'u32[144,128]{1,0:T(1,128)}', space=vmem, size = 0x12000, scoped, tag = 'internal scratch']
  #allocation2 [shape = 'f32[128,128]{1,0:T(8,128)}', space=vmem, size = 0x10000, scoped, tag = 'scratch operand']
  %s0 = inlined_call_operand.hbm [shape: f32[8,80,128], index: 0, kind: input, shape index: {}]
  %s1 = inlined_call_operand.hbm [shape: f32[768,128], index: 1, kind: input, shape index: {}]
  %s2 = inlined_call_operand.hbm [shape: f32[8,128], index: 2, kind: input, shape index: {}]
  %s3 = inlined_call_operand.hbm [shape: f32[8,8,128], index: 3, kind: output, shape index: {}]
  %s4 = sld [smem:[#allocation0]]
  $region57: #{tpu_custom_call.1} parent=0
    _
  %s6 = ssub.s32 1, %s4
  %s7 = scalar_select 0, %s6, %s4
  $region1: #{tpu_custom_call.1} parent=0
    #allocation3 [shape = 'u8[81920]{0}', space=vmem, size = 0x14000, scoped, tag = 'input window, operand 0']
    #allocation4 [shape = 's32[2]{0}', space=sflag, size = 0x8, scoped, tag = 'scoped memory for tpu_custom_call.1']
    #allocation5 [shape = 's32[2]{0}', space=sflag, size = 0x8, scoped, tag = 'scoped memory for tpu_custom_call.1']
    #allocation6 [shape = 'u8[393216]{0}', space=vmem, size = 0x60000, scoped, tag = 'input window, operand 1, single buffered']
    #allocation7 [shape = 's32[1]{0}', space=sflag, size = 0x4, scoped, tag = 'scoped memory for tpu_custom_call.1']
    #allocation8 [shape = 'u8[4096]{0}', space=vmem, size = 0x1000, scoped, tag = 'input window, operand 2, single buffered']
    #allocation9 [shape = 'u8[8192]{0}', space=vmem, size = 0x2000, scoped, tag = 'output window, operand 0']
    %8 = vsyncpa [#allocation4], 0
    %s9 = scalar_lea.sflag [#allocation4], 1
    %10 = vsyncpa %s9, 0
    %11 = vsyncpa [#allocation7], 0
    %12 = vsyncpa [#allocation5], 0
    %s13 = scalar_lea.sflag [#allocation5], 1
    %14 = vsyncpa %s13, 0
    loop: start=0, step=1, limit=10
    $region2: #{tpu_custom_call.1} parent=1 // loop_pre_header
      _
    $region3: #{tpu_custom_call.1} parent=1 // loop_header
      %s16 = sphi 0, %s20
      %p17 = scmp.ge.s32.totalorder %s16, 10
      %s26 = sphi 0, %s28
      %s29 = sphi 0, %s26
      %s30 = sphi 0, %s29
      %s46 = sphi 0, %s30
      %s50 = sphi 0, %s50
      %s52 = sphi 0, %s50
      %s53 = sphi 0, %s52
      %s67 = sphi 0, %s53
      %s71 = sphi 0, %s71
      %s73 = sphi 0, %s71
      %s74 = sphi 0, %s73
      %s88 = sphi 0, %s74
      %s94 = sphi 0, %s96
      %s97 = sphi 0, %s94
      %s98 = sphi 0, %s97
      %s114 = sphi 0, %s98
    $region4: #{tpu_custom_call.1} parent=1 // loop_header_branch
      %19 = sbr.rel (%p17) target = $region8
    $region5: #{tpu_custom_call.1} parent=1 // loop_body
      %s21 = ssub.s32 %s16, 1
      %s22 = ssub.s32 %s16, 2
      %s23 = sadd.s32 %s16, 1
      %s24 = ssub.s32 %s16, %s23
      %p25 = scmp.eq.s32.totalorder %s24, 0
      %s27 = sadd.s32 %s26, 1
      %s28 = scalar_select %p25, %s26, %s27
      %p31 = pneg %p25
      %p32 = scmp.eq.s32.totalorder %s16, 7
      %p33 = por %p31, %p32
      %p34 = scmp.ne.s32.totalorder %s26, %s29
      %p35 = scmp.eq.s32.totalorder %s16, 0
      %p36 = por %p34, %p35
      %p37 = scmp.ne.s32.totalorder %s26, %s29
      %p38 = scmp.eq.s32.totalorder %s21, 7
      %p39 = por %p37, %p38
      %p40 = scmp.ne.s32.totalorder %s29, %s30
      %p41 = scmp.eq.s32.totalorder %s21, 0
      %p42 = por %p40, %p41
      %p43 = scmp.ne.s32.totalorder %s29, %s30
      %p44 = scmp.eq.s32.totalorder %s22, 7
      %p45 = por %p43, %p44
      %p47 = scmp.ne.s32.totalorder %s30, %s46
      %p48 = scmp.eq.s32.totalorder %s22, 0
      %p49 = por %p47, %p48
      %s51 = sadd.s32 %s50, 1
      %p54 = scmp.eq.s32.totalorder %s16, 7
      %p55 = scmp.ne.s32.totalorder %s50, %s52
      %p56 = scmp.eq.s32.totalorder %s16, 0
      %p57 = por %p55, %p56
      %p58 = scmp.ne.s32.totalorder %s50, %s52
      %p59 = scmp.eq.s32.totalorder %s21, 7
      %p60 = por %p58, %p59
      %p61 = scmp.ne.s32.totalorder %s52, %s53
      %p62 = scmp.eq.s32.totalorder %s21, 0
      %p63 = por %p61, %p62
      %p64 = scmp.ne.s32.totalorder %s52, %s53
      %p65 = scmp.eq.s32.totalorder %s22, 7
      %p66 = por %p64, %p65
      %p68 = scmp.ne.s32.totalorder %s53, %s67
      %p69 = scmp.eq.s32.totalorder %s22, 0
      %p70 = por %p68, %p69
      %s72 = sadd.s32 %s71, 1
      %p75 = scmp.eq.s32.totalorder %s16, 7
      %p76 = scmp.ne.s32.totalorder %s71, %s73
      %p77 = scmp.eq.s32.totalorder %s16, 0
      %p78 = por %p76, %p77
      %p79 = scmp.ne.s32.totalorder %s71, %s73
      %p80 = scmp.eq.s32.totalorder %s21, 7
      %p81 = por %p79, %p80
      %p82 = scmp.ne.s32.totalorder %s73, %s74
      %p83 = scmp.eq.s32.totalorder %s21, 0
      %p84 = por %p82, %p83
      %p85 = scmp.ne.s32.totalorder %s73, %s74
      %p86 = scmp.eq.s32.totalorder %s22, 7
      %p87 = por %p85, %p86
      %p89 = scmp.ne.s32.totalorder %s74, %s88
      %p90 = scmp.eq.s32.totalorder %s22, 0
      %p91 = por %p89, %p90
      %s92 = ssub.s32 %s16, %s23
      %p93 = scmp.eq.s32.totalorder %s92, 0
      %s95 = sadd.s32 %s94, 1
      %s96 = scalar_select %p93, %s94, %s95
      %p99 = pneg %p93
      %p100 = scmp.eq.s32.totalorder %s16, 7
      %p101 = por %p99, %p100
      %p102 = scmp.ne.s32.totalorder %s94, %s97
      %p103 = scmp.eq.s32.totalorder %s16, 0
      %p104 = por %p102, %p103
      %p105 = scmp.ne.s32.totalorder %s94, %s97
      %p106 = scmp.eq.s32.totalorder %s21, 7
      %p107 = por %p105, %p106
      %p108 = scmp.ne.s32.totalorder %s97, %s98
      %p109 = scmp.eq.s32.totalorder %s21, 0
      %p110 = por %p108, %p109
      %p111 = scmp.ne.s32.totalorder %s97, %s98
      %p112 = scmp.eq.s32.totalorder %s22, 7
      %p113 = por %p111, %p112
      %p115 = scmp.ne.s32.totalorder %s98, %s114
      %p116 = scmp.eq.s32.totalorder %s22, 0
      %p117 = por %p115, %p116
      %p118 = scmp.le.s32.totalorder 1, %s16
      %p119 = scmp.lt.s32.totalorder %s16, 9
      %p120 = pnand %p118, %p119
      %p121 = pneg %p120
      // Predicated region
      $region9: #{tpu_custom_call.1} parent=5 // pred_check
        _
      $region10: #{tpu_custom_call.1} parent=5 // pred_check_branch
        %123 = sbr.rel (%p120) target = $region12
      $region11: #{tpu_custom_call.1} parent=5 // pred_region
        %s124 = ssub.s32 %s16, 1
        // Predicated region
        $region13: #{tpu_custom_call.1} parent=11 // pred_check
          %p125 = pneg %p63
        $region14: #{tpu_custom_call.1} parent=11 // pred_check_branch
          %127 = sbr.rel (%p125) target = $region16
        $region15: #{tpu_custom_call.1} parent=11 // pred_region
          %s129 = ssub.s32 12288, 12288
          %130 = vsyncadd [#allocation7], %s129
          %s131 = sshll.u32 [#allocation6], 4
          %s132 = int_to_ptr.vmem [resolvable:$true] %s131
          %137 = dma.hbm_to_vmem [thread:$0]  %s1, 12288, %s132, [#allocation7], 128, 128, 8
        $region16: #{tpu_custom_call.1} parent=11 // pred_fallthru
          _
        // Predicated region
        $region17: #{tpu_custom_call.1} parent=11 // pred_check
          %p138 = pneg %p84
        $region18: #{tpu_custom_call.1} parent=11 // pred_check_branch
          %140 = sbr.rel (%p138) target = $region20
        $region19: #{tpu_custom_call.1} parent=11 // pred_region
          %s142 = ssub.s32 128, 128
          %143 = vsyncadd [#allocation7], %s142
          %s145 = sshll.u32 [#allocation8], 4
          %s146 = int_to_ptr.vmem [resolvable:$true] %s145
          %148 = dma.hbm_to_vmem [thread:$0]  %s2, 128, %s146, [#allocation7]
        $region20: #{tpu_custom_call.1} parent=11 // pred_fallthru
          _
      $region12: #{tpu_custom_call.1} parent=5 // pred_fallthru
        _
      %p149 = scmp.lt.s32.totalorder %s16, 8
      // Predicated region
      $region21: #{tpu_custom_call.1} parent=5 // pred_check
        %p150 = pneg %p149
      $region22: #{tpu_custom_call.1} parent=5 // pred_check_branch
        %152 = sbr.rel (%p150) target = $region24
      $region23: #{tpu_custom_call.1} parent=5 // pred_region
        // Predicated region
        $region25: #{tpu_custom_call.1} parent=23 // pred_check
          %p153 = pneg %p36
        $region26: #{tpu_custom_call.1} parent=23 // pred_check_branch
          %155 = sbr.rel (%p153) target = $region28
        $region27: #{tpu_custom_call.1} parent=23 // pred_region
          %s156 = sand.u32 %s26, 1
          %s157 = scalar_lea.sflag [#allocation4], %s156
          %s158 = sand.u32 %s26, 1
          %s159 = smul.addr %s158, 80
          %s160 = scalar_lea.vmem [#allocation3], %s159
          %s162 = ssub.s32 1280, 1280
          %163 = vsyncadd %s157, %s162
          %s164 = smul.addr %s16, 10
          %s165 = smul.addr %s164, 128
          %s166 = scalar_lea.hbm %s0, %s165
          %s167 = sshll.u32 %s160, 4
          %s168 = int_to_ptr.vmem [resolvable:$true] %s167
          %173 = dma.hbm_to_vmem [thread:$0]  %s166, 1280, %s168, %s157, 128, 128, 8
        $region28: #{tpu_custom_call.1} parent=23 // pred_fallthru
          _
      $region24: #{tpu_custom_call.1} parent=5 // pred_fallthru
        _
      %p174 = scmp.le.s32.totalorder 1, %s16
      %p175 = scmp.lt.s32.totalorder %s16, 9
      %p176 = pnand %p174, %p175
      %p177 = pneg %p176
      // Predicated region
      $region29: #{tpu_custom_call.1} parent=5 // pred_check
        _
      $region30: #{tpu_custom_call.1} parent=5 // pred_check_branch
        %179 = sbr.rel (%p176) target = $region32
      $region31: #{tpu_custom_call.1} parent=5 // pred_region
        %s180 = ssub.s32 %s16, 1
        %s181 = sand.u32 %s29, 1
        %s182 = scalar_lea.sflag [#allocation4], %s181
        %s183 = sand.u32 %s29, 1
        %s184 = smul.addr %s183, 80
        %s185 = scalar_lea.vmem [#allocation3], %s184
        // Predicated region
        $region33: #{tpu_custom_call.1} parent=31 // pred_check
          %p186 = pneg %p42
        $region34: #{tpu_custom_call.1} parent=31 // pred_check_branch
          %188 = sbr.rel (%p186) target = $region36
        $region35: #{tpu_custom_call.1} parent=31 // pred_region
          %189 = dma.done %s182, 1280
        $region36: #{tpu_custom_call.1} parent=31 // pred_fallthru
          _
        // Predicated region
        $region37: #{tpu_custom_call.1} parent=31 // pred_check
          %p190 = pneg %p63
        $region38: #{tpu_custom_call.1} parent=31 // pred_check_branch
          %192 = sbr.rel (%p190) target = $region40
        $region39: #{tpu_custom_call.1} parent=31 // pred_region
          %193 = dma.done [#allocation7], 12288
        $region40: #{tpu_custom_call.1} parent=31 // pred_fallthru
          _
        // Predicated region
        $region41: #{tpu_custom_call.1} parent=31 // pred_check
          %p194 = pneg %p84
        $region42: #{tpu_custom_call.1} parent=31 // pred_check_branch
          %196 = sbr.rel (%p194) target = $region44
        $region43: #{tpu_custom_call.1} parent=31 // pred_region
          %197 = dma.done [#allocation7], 128
        $region44: #{tpu_custom_call.1} parent=31 // pred_fallthru
          _
        %s198 = sand.u32 %s29, 1
        %s199 = scalar_lea.sflag [#allocation4], %s198
        %s200 = sand.u32 %s29, 1
        %s201 = smul.addr %s200, 80
        %s202 = scalar_lea.vmem [#allocation3], %s201
        %p203 = pneg %p42
        %p204 = pneg %p39
        %p205 = pneg %p63
        %p206 = pneg %p60
        %p207 = pneg %p84
        %p208 = pneg %p81
        %p209 = pneg %p110
        %p210 = pneg %p107
        %s211 = sand.u32 %s97, 1
        %s212 = scalar_lea.sflag [#allocation5], %s211
        %s213 = sand.u32 %s97, 1
        %s214 = smul.addr %s213, 8
        %s215 = scalar_lea.vmem [#allocation9], %s214
        %v216 = vld [vmem:[%s185 + $0x10] sm:$0xff]
        %v217 = vld [vmem:[%s185 + $0x18] sm:$0xff]
        %v218 = vld [vmem:[%s185 + $0x20] sm:$0xff]
        %v219 = vld [vmem:[#allocation6] sm:$0xff]
        %v220 = vld [vmem:[#allocation6 + $0x8] sm:$0xff]
        %v221 = vld [vmem:[#allocation6 + $0x10] sm:$0xff]
        %v222 = vld [vmem:[#allocation6 + $0x18] sm:$0xff]
        %v223 = vld [vmem:[#allocation6 + $0x20] sm:$0xff]
        %v224 = vld [vmem:[#allocation6 + $0x28] sm:$0xff]
        %v225 = vld [vmem:[#allocation6 + $0x30] sm:$0xff]
        %v226 = vld [vmem:[#allocation6 + $0x38] sm:$0xff]
        %v227 = vld [vmem:[#allocation6 + $0x40] sm:$0xff]
        %v228 = vld [vmem:[#allocation6 + $0x48] sm:$0xff]
        %v229 = vld [vmem:[#allocation6 + $0x50] sm:$0xff]
        %v230 = vld [vmem:[#allocation6 + $0x58] sm:$0xff]
        %v231 = vld [vmem:[#allocation6 + $0x60] sm:$0xff]
        %v232 = vld [vmem:[#allocation6 + $0x68] sm:$0xff]
        %v233 = vld [vmem:[#allocation6 + $0x70] sm:$0xff]
        %v234 = vld [vmem:[#allocation6 + $0x78] sm:$0xff]
        %v235 = vld [vmem:[#allocation8] sm:$0x1]
        %v236 = vlaneseq
        %v237 = vshrl.u32 %v236, 7
        %v238 = vsub.s32 0, %v237
        %v239 = vrot.slane %v235, %v238
        %240 = vmatprep.subr.mxu0 0.0
        %241 = vmatpush1.msra.mxu0 %v219
        %242 = vmatprep.subr.mxu0 0.0
        %243 = vmatpush1.msra.mxu0 %v220
        %244 = vmatprep.subr.mxu0 0.0
        %245 = vmatpush1.msra.mxu0 %v221
        %246 = vmatprep.subr.mxu0 0.0
        %247 = vmatpush1.msra.mxu0 %v222
        %248 = vmatprep.subr.mxu0 0.0
        %249 = vmatpush1.msra.mxu0 %v223
        %250 = vmatprep.subr.mxu0 0.0
        %251 = vmatpush1.msra.mxu0 %v224
        %252 = vmatprep.subr.mxu0 0.0
        %253 = vmatpush1.msra.mxu0 %v225
        %254 = vmatprep.subr.mxu0 0.0
        %255 = vmatpush1.msra.mxu0 %v226
        %256 = vmatprep.subr.mxu0 0.0
        %257 = vmatpush1.msra.mxu0 %v227
        %258 = vmatprep.subr.mxu0 0.0
        %259 = vmatpush1.msra.mxu0 %v228
        %260 = vmatprep.subr.mxu0 0.0
        %261 = vmatpush1.msra.mxu0 %v229
        %262 = vmatprep.subr.mxu0 0.0
        %263 = vmatpush1.msra.mxu0 %v230
        %264 = vmatprep.subr.mxu0 0.0
        %265 = vmatpush1.msra.mxu0 %v231
        %266 = vmatprep.subr.mxu0 0.0
        %267 = vmatpush1.msra.mxu0 %v232
        %268 = vmatprep.subr.mxu0 0.0
        %269 = vmatpush1.msra.mxu0 %v233
        %270 = vmatprep.subr.mxu0 0.0
        %271 = vmatpush1.msra.mxu0 %v234
        %272 = vmatprep.subr.mxu0 0.0
        %273 = vmatpush1.msra.mxu0 0.0
        %274 = vmatprep.subr.mxu0 0.0
        %275 = vmatpush1.msra.mxu0 0.0
        %276 = vmatprep.subr.mxu0 0.0
        %277 = vmatpush1.msra.mxu0 0.0
        %278 = vmatprep.subr.mxu0 0.0
        %279 = vmatpush1.msra.mxu0 0.0
        %280 = vmatprep.subr.mxu0 0.0
        %281 = vmatpush1.msra.mxu0 0.0
        %282 = vmatprep.subr.mxu0 0.0
        %283 = vmatpush1.msra.mxu0 0.0
        %284 = vmatprep.subr.mxu0 0.0
        %285 = vmatpush1.msra.mxu0 0.0
        %286 = vmatprep.subr.mxu0 0.0
        %287 = vmatpush1.msra.mxu0 0.0
        %288 = vmatprep.subr.mxu0 0.0
        %289 = vmatpush1.msra.mxu0 0.0
        %290 = vmatprep.subr.mxu0 0.0
        %291 = vmatpush1.msra.mxu0 0.0
        %292 = vmatprep.subr.mxu0 0.0
        %293 = vmatpush1.msra.mxu0 0.0
        %294 = vmatprep.subr.mxu0 0.0
        %295 = vmatpush1.msra.mxu0 0.0
        %296 = vmatprep.subr.mxu0 0.0
        %297 = vmatpush1.msra.mxu0 0.0
        %298 = vmatprep.subr.mxu0 0.0
        %299 = vmatpush1.msra.mxu0 0.0
        %300 = vmatprep.subr.mxu0 0.0
        %301 = vmatpush1.msra.mxu0 0.0
        %302 = vmatprep.subr.mxu0 0.0
        %303 = vmatpush1.msra.mxu0 0.0
        %304 = vmatprep.mubr.f32.mxu0 0.0
        %305 = vmatmul.mubr.f32.gmra.mrb[0].mxu0 %v216
        %v306 = vpop.f32.mrb[0].mxu0
        %v307 = vadd.f32 %v239, %v306
        %v308 = vpop.f32.mrb[0].mxu0
        %309 = vmatprep.mubr.f32.mxu0 0.0
        %310 = vmatmul.mubr.f32.gmra.mrb[0].mxu0 %v217
        %v311 = vpop.f32.mrb[0].mxu0
        %v312 = vadd.f32 %v239, %v311
        %v313 = vpop.f32.mrb[0].mxu0
        %314 = vmatprep.mubr.f32.mxu0 0.0
        %315 = vmatmul.mubr.f32.gmra.mrb[0].mxu0 %v218
        %v316 = vpop.f32.mrb[0].mxu0
        %v317 = vadd.f32 %v239, %v316
        %v318 = vpop.f32.mrb[0].mxu0
        %319 = vdwg.mxu0
        %v320 = vmax.f32 %v307, 0.0
        %v321 = vmax.f32 %v312, 0.0
        %v322 = vmax.f32 %v317, 0.0
        %v323 = vld [vmem:[#allocation6 + $0x80] sm:$0xff]
        %v324 = vld [vmem:[#allocation6 + $0x88] sm:$0xff]
        %v325 = vld [vmem:[#allocation6 + $0x90] sm:$0xff]
        %v326 = vld [vmem:[#allocation6 + $0x98] sm:$0xff]
        %v327 = vld [vmem:[#allocation6 + $0xa0] sm:$0xff]
        %v328 = vld [vmem:[#allocation6 + $0xa8] sm:$0xff]
        %v329 = vld [vmem:[#allocation6 + $0xb0] sm:$0xff]
        %v330 = vld [vmem:[#allocation6 + $0xb8] sm:$0xff]
        %v331 = vld [vmem:[#allocation6 + $0xc0] sm:$0xff]
        %v332 = vld [vmem:[#allocation6 + $0xc8] sm:$0xff]
        %v333 = vld [vmem:[#allocation6 + $0xd0] sm:$0xff]
        %v334 = vld [vmem:[#allocation6 + $0xd8] sm:$0xff]
        %v335 = vld [vmem:[#allocation6 + $0xe0] sm:$0xff]
        %v336 = vld [vmem:[#allocation6 + $0xe8] sm:$0xff]
        %v337 = vld [vmem:[#allocation6 + $0xf0] sm:$0xff]
        %v338 = vld [vmem:[#allocation6 + $0xf8] sm:$0xff]
        %v339 = vld [vmem:[#allocation8 + $0x1] sm:$0x1]
        %v340 = vlaneseq
        %v341 = vshrl.u32 %v340, 7
        %v342 = vsub.s32 0, %v341
        %v343 = vrot.slane %v339, %v342
        %344 = vmatprep.subr.mxu0 0.0
        %345 = vmatpush1.msra.mxu0 %v323
        %346 = vmatprep.subr.mxu0 0.0
        %347 = vmatpush1.msra.mxu0 %v324
        %348 = vmatprep.subr.mxu0 0.0
        %349 = vmatpush1.msra.mxu0 %v325
        %350 = vmatprep.subr.mxu0 0.0
        %351 = vmatpush1.msra.mxu0 %v326
        %352 = vmatprep.subr.mxu0 0.0
        %353 = vmatpush1.msra.mxu0 %v327
        %354 = vmatprep.subr.mxu0 0.0
        %355 = vmatpush1.msra.mxu0 %v328
        %356 = vmatprep.subr.mxu0 0.0
        %357 = vmatpush1.msra.mxu0 %v329
        %358 = vmatprep.subr.mxu0 0.0
        %359 = vmatpush1.msra.mxu0 %v330
        %360 = vmatprep.subr.mxu0 0.0
        %361 = vmatpush1.msra.mxu0 %v331
        %362 = vmatprep.subr.mxu0 0.0
        %363 = vmatpush1.msra.mxu0 %v332
        %364 = vmatprep.subr.mxu0 0.0
        %365 = vmatpush1.msra.mxu0 %v333
        %366 = vmatprep.subr.mxu0 0.0
        %367 = vmatpush1.msra.mxu0 %v334
        %368 = vmatprep.subr.mxu0 0.0
        %369 = vmatpush1.msra.mxu0 %v335
        %370 = vmatprep.subr.mxu0 0.0
        %371 = vmatpush1.msra.mxu0 %v336
        %372 = vmatprep.subr.mxu0 0.0
        %373 = vmatpush1.msra.mxu0 %v337
        %374 = vmatprep.subr.mxu0 0.0
        %375 = vmatpush1.msra.mxu0 %v338
        %376 = vmatprep.subr.mxu0 0.0
        %377 = vmatpush1.msra.mxu0 0.0
        %378 = vmatprep.subr.mxu0 0.0
        %379 = vmatpush1.msra.mxu0 0.0
        %380 = vmatprep.subr.mxu0 0.0
        %381 = vmatpush1.msra.mxu0 0.0
        %382 = vmatprep.subr.mxu0 0.0
        %383 = vmatpush1.msra.mxu0 0.0
        %384 = vmatprep.subr.mxu0 0.0
        %385 = vmatpush1.msra.mxu0 0.0
        %386 = vmatprep.subr.mxu0 0.0
        %387 = vmatpush1.msra.mxu0 0.0
        %388 = vmatprep.subr.mxu0 0.0
        %389 = vmatpush1.msra.mxu0 0.0
        %390 = vmatprep.subr.mxu0 0.0
        %391 = vmatpush1.msra.mxu0 0.0
        %392 = vmatprep.subr.mxu0 0.0
        %393 = vmatpush1.msra.mxu0 0.0
        %394 = vmatprep.subr.mxu0 0.0
        %395 = vmatpush1.msra.mxu0 0.0
        %396 = vmatprep.subr.mxu0 0.0
        %397 = vmatpush1.msra.mxu0 0.0
        %398 = vmatprep.subr.mxu0 0.0
        %399 = vmatpush1.msra.mxu0 0.0
        %400 = vmatprep.subr.mxu0 0.0
        %401 = vmatpush1.msra.mxu0 0.0
        %402 = vmatprep.subr.mxu0 0.0
        %403 = vmatpush1.msra.mxu0 0.0
        %404 = vmatprep.subr.mxu0 0.0
        %405 = vmatpush1.msra.mxu0 0.0
        %406 = vmatprep.subr.mxu0 0.0
        %407 = vmatpush1.msra.mxu0 0.0
        %408 = vmatprep.mubr.f32.mxu0 0.0
        %409 = vmatmul.mubr.f32.gmra.mrb[0].mxu0 %v320
        %v410 = vpop.f32.mrb[0].mxu0
        %v411 = vadd.f32 %v343, %v410
        %v412 = vpop.f32.mrb[0].mxu0
        %413 = vmatprep.mubr.f32.mxu0 0.0
        %414 = vmatmul.mubr.f32.gmra.mrb[0].mxu0 %v321
        %v415 = vpop.f32.mrb[0].mxu0
        %v416 = vadd.f32 %v343, %v415
        %v417 = vpop.f32.mrb[0].mxu0
        %418 = vmatprep.mubr.f32.mxu0 0.0
        %419 = vmatmul.mubr.f32.gmra.mrb[0].mxu0 %v322
        %v420 = vpop.f32.mrb[0].mxu0
        %v421 = vadd.f32 %v343, %v420
        %v422 = vpop.f32.mrb[0].mxu0
        %423 = vdwg.mxu0
        %v424 = vmax.f32 %v411, 0.0
        %v425 = vmax.f32 %v416, 0.0
        %v426 = vmax.f32 %v421, 0.0
        %v427 = vld [vmem:[%s185] sm:$0xff]
        %v428 = vld [vmem:[%s185 + $0x8] sm:$0xff]
        %429 = vst [vmem:[#allocation2] sm:$0xff] %v427
        %430 = vst [vmem:[#allocation2 + $0x8] sm:$0xff] %v428
        %431 = vst [vmem:[#allocation2 + $0x10] sm:$0xff] %v424
        %432 = vst [vmem:[#allocation2 + $0x18] sm:$0xff] %v425
        %433 = vst [vmem:[#allocation2 + $0x20] sm:$0xff] %v426
        %434 = vst [vmem:[#allocation2 + $0x28] sm:$0xff] 0.0
        %435 = vst [vmem:[#allocation2 + $0x30] sm:$0xff] 0.0
        %436 = vst [vmem:[#allocation2 + $0x38] sm:$0xff] 0.0
        %437 = vst [vmem:[#allocation2 + $0x40] sm:$0xff] 0.0
        %438 = vst [vmem:[#allocation2 + $0x48] sm:$0xff] 0.0
        %439 = vst [vmem:[#allocation2 + $0x50] sm:$0xff] 0.0
        %440 = vst [vmem:[#allocation2 + $0x58] sm:$0xff] 0.0
        %441 = vst [vmem:[#allocation2 + $0x60] sm:$0xff] 0.0
        %442 = vst [vmem:[#allocation2 + $0x68] sm:$0xff] 0.0
        %443 = vst [vmem:[#allocation2 + $0x70] sm:$0xff] 0.0
        %444 = vst [vmem:[#allocation2 + $0x78] sm:$0xff] 0.0
        %v445 = vld [vmem:[%s185 + $0x28] sm:$0xff]
        %v446 = vld [vmem:[%s185 + $0x30] sm:$0xff]
        %v447 = vld [vmem:[#allocation2] sm:$0xff]
        %v448 = vld [vmem:[#allocation2 + $0x8] sm:$0xff]
        %v449 = vld [vmem:[#allocation2 + $0x10] sm:$0xff]
        %v450 = vld [vmem:[#allocation2 + $0x18] sm:$0xff]
        %v451 = vld [vmem:[#allocation2 + $0x20] sm:$0xff]
        %v452 = vld [vmem:[#allocation2 + $0x28] sm:$0xff]
        %v453 = vld [vmem:[#allocation2 + $0x30] sm:$0xff]
        %v454 = vld [vmem:[#allocation2 + $0x38] sm:$0xff]
        %v455 = vld [vmem:[#allocation2 + $0x40] sm:$0xff]
        %v456 = vld [vmem:[#allocation2 + $0x48] sm:$0xff]
        %v457 = vld [vmem:[#allocation2 + $0x50] sm:$0xff]
        %v458 = vld [vmem:[#allocation2 + $0x58] sm:$0xff]
        %v459 = vld [vmem:[#allocation2 + $0x60] sm:$0xff]
        %v460 = vld [vmem:[#allocation2 + $0x68] sm:$0xff]
        %v461 = vld [vmem:[#allocation2 + $0x70] sm:$0xff]
        %v462 = vld [vmem:[#allocation2 + $0x78] sm:$0xff]
        %463 = vmatprep.subr.mxu0 0.0
        %464 = vmatpush1.msra.mxu0 %v447
        %465 = vmatprep.subr.mxu0 0.0
        %466 = vmatpush1.msra.mxu0 %v448
        %467 = vmatprep.subr.mxu0 0.0
        %468 = vmatpush1.msra.mxu0 %v449
        %469 = vmatprep.subr.mxu0 0.0
        %470 = vmatpush1.msra.mxu0 %v450
        %471 = vmatprep.subr.mxu0 0.0
        %472 = vmatpush1.msra.mxu0 %v451
        %473 = vmatprep.subr.mxu0 0.0
        %474 = vmatpush1.msra.mxu0 %v452
        %475 = vmatprep.subr.mxu0 0.0
        %476 = vmatpush1.msra.mxu0 %v453
        %477 = vmatprep.subr.mxu0 0.0
        %478 = vmatpush1.msra.mxu0 %v454
        %479 = vmatprep.subr.mxu0 0.0
        %480 = vmatpush1.msra.mxu0 %v455
        %481 = vmatprep.subr.mxu0 0.0
        %482 = vmatpush1.msra.mxu0 %v456
        %483 = vmatprep.subr.mxu0 0.0
        %484 = vmatpush1.msra.mxu0 %v457
        %485 = vmatprep.subr.mxu0 0.0
        %486 = vmatpush1.msra.mxu0 %v458
        %487 = vmatprep.subr.mxu0 0.0
        %488 = vmatpush1.msra.mxu0 %v459
        %489 = vmatprep.subr.mxu0 0.0
        %490 = vmatpush1.msra.mxu0 %v460
        %491 = vmatprep.subr.mxu0 0.0
        %492 = vmatpush1.msra.mxu0 %v461
        %493 = vmatprep.subr.mxu0 0.0
        %494 = vmatpush1.msra.mxu0 %v462
        %495 = vmatprep.subr.mxu0 0.0
        %496 = vmatpush1.msra.mxu0 0.0
        %497 = vmatprep.subr.mxu0 0.0
        %498 = vmatpush1.msra.mxu0 0.0
        %499 = vmatprep.subr.mxu0 0.0
        %500 = vmatpush1.msra.mxu0 0.0
        %501 = vmatprep.subr.mxu0 0.0
        %502 = vmatpush1.msra.mxu0 0.0
        %503 = vmatprep.subr.mxu0 0.0
        %504 = vmatpush1.msra.mxu0 0.0
        %505 = vmatprep.subr.mxu0 0.0
        %506 = vmatpush1.msra.mxu0 0.0
        %507 = vmatprep.subr.mxu0 0.0
        %508 = vmatpush1.msra.mxu0 0.0
        %509 = vmatprep.subr.mxu0 0.0
        %510 = vmatpush1.msra.mxu0 0.0
        %511 = vmatprep.subr.mxu0 0.0
        %512 = vmatpush1.msra.mxu0 0.0
        %513 = vmatprep.subr.mxu0 0.0
        %514 = vmatpush1.msra.mxu0 0.0
        %515 = vmatprep.subr.mxu0 0.0
        %516 = vmatpush1.msra.mxu0 0.0
        %517 = vmatprep.subr.mxu0 0.0
        %518 = vmatpush1.msra.mxu0 0.0
        %519 = vmatprep.subr.mxu0 0.0
        %520 = vmatpush1.msra.mxu0 0.0
        %521 = vmatprep.subr.mxu0 0.0
        %522 = vmatpush1.msra.mxu0 0.0
        %523 = vmatprep.subr.mxu0 0.0
        %524 = vmatpush1.msra.mxu0 0.0
        %525 = vmatprep.subr.mxu0 0.0
        %526 = vmatpush1.msra.mxu0 0.0
        %527 = vmatprep.mubr.f32.mxu0 0.0
        %528 = vmatmul.mubr.f32.gmra.mrb[0].mxu0 %v445
        %v529 = vpop.f32.mrb[0].mxu0
        %v530 = vadd.f32 0.0, %v529
        %v531 = vpop.f32.mrb[0].mxu0
        %532 = vmatprep.mubr.f32.mxu0 0.0
        %533 = vmatmul.mubr.f32.gmra.mrb[0].mxu0 %v446
        %v534 = vpop.f32.mrb[0].mxu0
        %v535 = vadd.f32 0.0, %v534
        %v536 = vpop.f32.mrb[0].mxu0
        %537 = vdwg.mxu0
        %v538 = vld [vmem:[#allocation6 + $0x100] sm:$0xff]
        %v539 = vld [vmem:[#allocation6 + $0x108] sm:$0xff]
        %v540 = vld [vmem:[#allocation6 + $0x110] sm:$0xff]
        %v541 = vld [vmem:[#allocation6 + $0x118] sm:$0xff]
        %v542 = vld [vmem:[#allocation6 + $0x120] sm:$0xff]
        %v543 = vld [vmem:[#allocation6 + $0x128] sm:$0xff]
        %v544 = vld [vmem:[#allocation6 + $0x130] sm:$0xff]
        %v545 = vld [vmem:[#allocation6 + $0x138] sm:$0xff]
        %v546 = vld [vmem:[#allocation6 + $0x140] sm:$0xff]
        %v547 = vld [vmem:[#allocation6 + $0x148] sm:$0xff]
        %v548 = vld [vmem:[#allocation6 + $0x150] sm:$0xff]
        %v549 = vld [vmem:[#allocation6 + $0x158] sm:$0xff]
        %v550 = vld [vmem:[#allocation6 + $0x160] sm:$0xff]
        %v551 = vld [vmem:[#allocation6 + $0x168] sm:$0xff]
        %v552 = vld [vmem:[#allocation6 + $0x170] sm:$0xff]
        %v553 = vld [vmem:[#allocation6 + $0x178] sm:$0xff]
        %v554 = vld [vmem:[#allocation8 + $0x2] sm:$0x1]
        %v555 = vlaneseq
        %v556 = vshrl.u32 %v555, 7
        %v557 = vsub.s32 0, %v556
        %v558 = vrot.slane %v554, %v557
        %559 = vmatprep.subr.mxu0 0.0
        %560 = vmatpush1.msra.mxu0 %v538
        %561 = vmatprep.subr.mxu0 0.0
        %562 = vmatpush1.msra.mxu0 %v539
        %563 = vmatprep.subr.mxu0 0.0
        %564 = vmatpush1.msra.mxu0 %v540
        %565 = vmatprep.subr.mxu0 0.0
        %566 = vmatpush1.msra.mxu0 %v541
        %567 = vmatprep.subr.mxu0 0.0
        %568 = vmatpush1.msra.mxu0 %v542
        %569 = vmatprep.subr.mxu0 0.0
        %570 = vmatpush1.msra.mxu0 %v543
        %571 = vmatprep.subr.mxu0 0.0
        %572 = vmatpush1.msra.mxu0 %v544
        %573 = vmatprep.subr.mxu0 0.0
        %574 = vmatpush1.msra.mxu0 %v545
        %575 = vmatprep.subr.mxu0 0.0
        %576 = vmatpush1.msra.mxu0 %v546
        %577 = vmatprep.subr.mxu0 0.0
        %578 = vmatpush1.msra.mxu0 %v547
        %579 = vmatprep.subr.mxu0 0.0
        %580 = vmatpush1.msra.mxu0 %v548
        %581 = vmatprep.subr.mxu0 0.0
        %582 = vmatpush1.msra.mxu0 %v549
        %583 = vmatprep.subr.mxu0 0.0
        %584 = vmatpush1.msra.mxu0 %v550
        %585 = vmatprep.subr.mxu0 0.0
        %586 = vmatpush1.msra.mxu0 %v551
        %587 = vmatprep.subr.mxu0 0.0
        %588 = vmatpush1.msra.mxu0 %v552
        %589 = vmatprep.subr.mxu0 0.0
        %590 = vmatpush1.msra.mxu0 %v553
        %591 = vmatprep.subr.mxu0 0.0
        %592 = vmatpush1.msra.mxu0 0.0
        %593 = vmatprep.subr.mxu0 0.0
        %594 = vmatpush1.msra.mxu0 0.0
        %595 = vmatprep.subr.mxu0 0.0
        %596 = vmatpush1.msra.mxu0 0.0
        %597 = vmatprep.subr.mxu0 0.0
        %598 = vmatpush1.msra.mxu0 0.0
        %599 = vmatprep.subr.mxu0 0.0
        %600 = vmatpush1.msra.mxu0 0.0
        %601 = vmatprep.subr.mxu0 0.0
        %602 = vmatpush1.msra.mxu0 0.0
        %603 = vmatprep.subr.mxu0 0.0
        %604 = vmatpush1.msra.mxu0 0.0
        %605 = vmatprep.subr.mxu0 0.0
        %606 = vmatpush1.msra.mxu0 0.0
        %607 = vmatprep.subr.mxu0 0.0
        %608 = vmatpush1.msra.mxu0 0.0
        %609 = vmatprep.subr.mxu0 0.0
        %610 = vmatpush1.msra.mxu0 0.0
        %611 = vmatprep.subr.mxu0 0.0
        %612 = vmatpush1.msra.mxu0 0.0
        %613 = vmatprep.subr.mxu0 0.0
        %614 = vmatpush1.msra.mxu0 0.0
        %615 = vmatprep.subr.mxu0 0.0
        %616 = vmatpush1.msra.mxu0 0.0
        %617 = vmatprep.subr.mxu0 0.0
        %618 = vmatpush1.msra.mxu0 0.0
        %619 = vmatprep.subr.mxu0 0.0
        %620 = vmatpush1.msra.mxu0 0.0
        %621 = vmatprep.subr.mxu0 0.0
        %622 = vmatpush1.msra.mxu0 0.0
        %623 = vmatprep.mubr.f32.mxu0 0.0
        %624 = vmatmul.mubr.f32.gmra.mrb[0].mxu0 %v530
        %v625 = vpop.f32.mrb[0].mxu0
        %v626 = vadd.f32 %v558, %v625
        %v627 = vpop.f32.mrb[0].mxu0
        %628 = vmatprep.mubr.f32.mxu0 0.0
        %629 = vmatmul.mubr.f32.gmra.mrb[0].mxu0 %v535
        %v630 = vpop.f32.mrb[0].mxu0
        %v631 = vadd.f32 %v558, %v630
        %v632 = vpop.f32.mrb[0].mxu0
        %633 = vdwg.mxu0
        %v634 = vmax.f32 %v626, 0.0
        %v635 = vmax.f32 %v631, 0.0
        %636 = vst [vmem:[#allocation2] sm:$0xff] %v634
        %637 = vst [vmem:[#allocation2 + $0x8] sm:$0xff] %v635
        %v638 = vld [vmem:[%s185 + $0x38] sm:$0xff]
        %v639 = vld [vmem:[%s185 + $0x40] sm:$0xff]
        %v640 = vld [vmem:[#allocation2] sm:$0xff]
        %v641 = vld [vmem:[#allocation2 + $0x8] sm:$0xff]
        %v642 = vld [vmem:[#allocation2 + $0x10] sm:$0xff]
        %v643 = vld [vmem:[#allocation2 + $0x18] sm:$0xff]
        %v644 = vld [vmem:[#allocation2 + $0x20] sm:$0xff]
        %v645 = vld [vmem:[#allocation2 + $0x28] sm:$0xff]
        %v646 = vld [vmem:[#allocation2 + $0x30] sm:$0xff]
        %v647 = vld [vmem:[#allocation2 + $0x38] sm:$0xff]
        %v648 = vld [vmem:[#allocation2 + $0x40] sm:$0xff]
        %v649 = vld [vmem:[#allocation2 + $0x48] sm:$0xff]
        %v650 = vld [vmem:[#allocation2 + $0x50] sm:$0xff]
        %v651 = vld [vmem:[#allocation2 + $0x58] sm:$0xff]
        %v652 = vld [vmem:[#allocation2 + $0x60] sm:$0xff]
        %v653 = vld [vmem:[#allocation2 + $0x68] sm:$0xff]
        %v654 = vld [vmem:[#allocation2 + $0x70] sm:$0xff]
        %v655 = vld [vmem:[#allocation2 + $0x78] sm:$0xff]
        %656 = vmatprep.subr.mxu0 0.0
        %657 = vmatpush1.msra.mxu0 %v640
        %658 = vmatprep.subr.mxu0 0.0
        %659 = vmatpush1.msra.mxu0 %v641
        %660 = vmatprep.subr.mxu0 0.0
        %661 = vmatpush1.msra.mxu0 %v642
        %662 = vmatprep.subr.mxu0 0.0
        %663 = vmatpush1.msra.mxu0 %v643
        %664 = vmatprep.subr.mxu0 0.0
        %665 = vmatpush1.msra.mxu0 %v644
        %666 = vmatprep.subr.mxu0 0.0
        %667 = vmatpush1.msra.mxu0 %v645
        %668 = vmatprep.subr.mxu0 0.0
        %669 = vmatpush1.msra.mxu0 %v646
        %670 = vmatprep.subr.mxu0 0.0
        %671 = vmatpush1.msra.mxu0 %v647
        %672 = vmatprep.subr.mxu0 0.0
        %673 = vmatpush1.msra.mxu0 %v648
        %674 = vmatprep.subr.mxu0 0.0
        %675 = vmatpush1.msra.mxu0 %v649
        %676 = vmatprep.subr.mxu0 0.0
        %677 = vmatpush1.msra.mxu0 %v650
        %678 = vmatprep.subr.mxu0 0.0
        %679 = vmatpush1.msra.mxu0 %v651
        %680 = vmatprep.subr.mxu0 0.0
        %681 = vmatpush1.msra.mxu0 %v652
        %682 = vmatprep.subr.mxu0 0.0
        %683 = vmatpush1.msra.mxu0 %v653
        %684 = vmatprep.subr.mxu0 0.0
        %685 = vmatpush1.msra.mxu0 %v654
        %686 = vmatprep.subr.mxu0 0.0
        %687 = vmatpush1.msra.mxu0 %v655
        %688 = vmatprep.subr.mxu0 0.0
        %689 = vmatpush1.msra.mxu0 0.0
        %690 = vmatprep.subr.mxu0 0.0
        %691 = vmatpush1.msra.mxu0 0.0
        %692 = vmatprep.subr.mxu0 0.0
        %693 = vmatpush1.msra.mxu0 0.0
        %694 = vmatprep.subr.mxu0 0.0
        %695 = vmatpush1.msra.mxu0 0.0
        %696 = vmatprep.subr.mxu0 0.0
        %697 = vmatpush1.msra.mxu0 0.0
        %698 = vmatprep.subr.mxu0 0.0
        %699 = vmatpush1.msra.mxu0 0.0
        %700 = vmatprep.subr.mxu0 0.0
        %701 = vmatpush1.msra.mxu0 0.0
        %702 = vmatprep.subr.mxu0 0.0
        %703 = vmatpush1.msra.mxu0 0.0
        %704 = vmatprep.subr.mxu0 0.0
        %705 = vmatpush1.msra.mxu0 0.0
        %706 = vmatprep.subr.mxu0 0.0
        %707 = vmatpush1.msra.mxu0 0.0
        %708 = vmatprep.subr.mxu0 0.0
        %709 = vmatpush1.msra.mxu0 0.0
        %710 = vmatprep.subr.mxu0 0.0
        %711 = vmatpush1.msra.mxu0 0.0
        %712 = vmatprep.subr.mxu0 0.0
        %713 = vmatpush1.msra.mxu0 0.0
        %714 = vmatprep.subr.mxu0 0.0
        %715 = vmatpush1.msra.mxu0 0.0
        %716 = vmatprep.subr.mxu0 0.0
        %717 = vmatpush1.msra.mxu0 0.0
        %718 = vmatprep.subr.mxu0 0.0
        %719 = vmatpush1.msra.mxu0 0.0
        %720 = vmatprep.mubr.f32.mxu0 0.0
        %721 = vmatmul.mubr.f32.gmra.mrb[0].mxu0 %v638
        %v722 = vpop.f32.mrb[0].mxu0
        %v723 = vadd.f32 0.0, %v722
        %v724 = vpop.f32.mrb[0].mxu0
        %725 = vmatprep.mubr.f32.mxu0 0.0
        %726 = vmatmul.mubr.f32.gmra.mrb[0].mxu0 %v639
        %v727 = vpop.f32.mrb[0].mxu0
        %v728 = vadd.f32 0.0, %v727
        %v729 = vpop.f32.mrb[0].mxu0
        %730 = vdwg.mxu0
        %v731 = vld [vmem:[#allocation6 + $0x180] sm:$0xff]
        %v732 = vld [vmem:[#allocation6 + $0x188] sm:$0xff]
        %v733 = vld [vmem:[#allocation6 + $0x190] sm:$0xff]
        %v734 = vld [vmem:[#allocation6 + $0x198] sm:$0xff]
        %v735 = vld [vmem:[#allocation6 + $0x1a0] sm:$0xff]
        %v736 = vld [vmem:[#allocation6 + $0x1a8] sm:$0xff]
        %v737 = vld [vmem:[#allocation6 + $0x1b0] sm:$0xff]
        %v738 = vld [vmem:[#allocation6 + $0x1b8] sm:$0xff]
        %v739 = vld [vmem:[#allocation6 + $0x1c0] sm:$0xff]
        %v740 = vld [vmem:[#allocation6 + $0x1c8] sm:$0xff]
        %v741 = vld [vmem:[#allocation6 + $0x1d0] sm:$0xff]
        %v742 = vld [vmem:[#allocation6 + $0x1d8] sm:$0xff]
        %v743 = vld [vmem:[#allocation6 + $0x1e0] sm:$0xff]
        %v744 = vld [vmem:[#allocation6 + $0x1e8] sm:$0xff]
        %v745 = vld [vmem:[#allocation6 + $0x1f0] sm:$0xff]
        %v746 = vld [vmem:[#allocation6 + $0x1f8] sm:$0xff]
        %v747 = vld [vmem:[#allocation8 + $0x3] sm:$0x1]
        %v748 = vlaneseq
        %v749 = vshrl.u32 %v748, 7
        %v750 = vsub.s32 0, %v749
        %v751 = vrot.slane %v747, %v750
        %752 = vmatprep.subr.mxu0 0.0
        %753 = vmatpush1.msra.mxu0 %v731
        %754 = vmatprep.subr.mxu0 0.0
        %755 = vmatpush1.msra.mxu0 %v732
        %756 = vmatprep.subr.mxu0 0.0
        %757 = vmatpush1.msra.mxu0 %v733
        %758 = vmatprep.subr.mxu0 0.0
        %759 = vmatpush1.msra.mxu0 %v734
        %760 = vmatprep.subr.mxu0 0.0
        %761 = vmatpush1.msra.mxu0 %v735
        %762 = vmatprep.subr.mxu0 0.0
        %763 = vmatpush1.msra.mxu0 %v736
        %764 = vmatprep.subr.mxu0 0.0
        %765 = vmatpush1.msra.mxu0 %v737
        %766 = vmatprep.subr.mxu0 0.0
        %767 = vmatpush1.msra.mxu0 %v738
        %768 = vmatprep.subr.mxu0 0.0
        %769 = vmatpush1.msra.mxu0 %v739
        %770 = vmatprep.subr.mxu0 0.0
        %771 = vmatpush1.msra.mxu0 %v740
        %772 = vmatprep.subr.mxu0 0.0
        %773 = vmatpush1.msra.mxu0 %v741
        %774 = vmatprep.subr.mxu0 0.0
        %775 = vmatpush1.msra.mxu0 %v742
        %776 = vmatprep.subr.mxu0 0.0
        %777 = vmatpush1.msra.mxu0 %v743
        %778 = vmatprep.subr.mxu0 0.0
        %779 = vmatpush1.msra.mxu0 %v744
        %780 = vmatprep.subr.mxu0 0.0
        %781 = vmatpush1.msra.mxu0 %v745
        %782 = vmatprep.subr.mxu0 0.0
        %783 = vmatpush1.msra.mxu0 %v746
        %784 = vmatprep.subr.mxu0 0.0
        %785 = vmatpush1.msra.mxu0 0.0
        %786 = vmatprep.subr.mxu0 0.0
        %787 = vmatpush1.msra.mxu0 0.0
        %788 = vmatprep.subr.mxu0 0.0
        %789 = vmatpush1.msra.mxu0 0.0
        %790 = vmatprep.subr.mxu0 0.0
        %791 = vmatpush1.msra.mxu0 0.0
        %792 = vmatprep.subr.mxu0 0.0
        %793 = vmatpush1.msra.mxu0 0.0
        %794 = vmatprep.subr.mxu0 0.0
        %795 = vmatpush1.msra.mxu0 0.0
        %796 = vmatprep.subr.mxu0 0.0
        %797 = vmatpush1.msra.mxu0 0.0
        %798 = vmatprep.subr.mxu0 0.0
        %799 = vmatpush1.msra.mxu0 0.0
        %800 = vmatprep.subr.mxu0 0.0
        %801 = vmatpush1.msra.mxu0 0.0
        %802 = vmatprep.subr.mxu0 0.0
        %803 = vmatpush1.msra.mxu0 0.0
        %804 = vmatprep.subr.mxu0 0.0
        %805 = vmatpush1.msra.mxu0 0.0
        %806 = vmatprep.subr.mxu0 0.0
        %807 = vmatpush1.msra.mxu0 0.0
        %808 = vmatprep.subr.mxu0 0.0
        %809 = vmatpush1.msra.mxu0 0.0
        %810 = vmatprep.subr.mxu0 0.0
        %811 = vmatpush1.msra.mxu0 0.0
        %812 = vmatprep.subr.mxu0 0.0
        %813 = vmatpush1.msra.mxu0 0.0
        %814 = vmatprep.subr.mxu0 0.0
        %815 = vmatpush1.msra.mxu0 0.0
        %816 = vmatprep.mubr.f32.mxu0 0.0
        %817 = vmatmul.mubr.f32.gmra.mrb[0].mxu0 %v723
        %v818 = vpop.f32.mrb[0].mxu0
        %v819 = vadd.f32 %v751, %v818
        %v820 = vpop.f32.mrb[0].mxu0
        %821 = vmatprep.mubr.f32.mxu0 0.0
        %822 = vmatmul.mubr.f32.gmra.mrb[0].mxu0 %v728
        %v823 = vpop.f32.mrb[0].mxu0
        %v824 = vadd.f32 %v751, %v823
        %v825 = vpop.f32.mrb[0].mxu0
        %826 = vdwg.mxu0
        %v827 = vmax.f32 %v819, 0.0
        %v828 = vmax.f32 %v824, 0.0
        %v829 = vlaneseq
        %v830 = vshrl.u32 %v829, 7
        %v831 = vadd.s32 %v830, 8
        %vm832 = vcmp.lt.s32.totalorder %v830, 12
        %vm833 = vcmp.lt.s32.totalorder %v831, 12
        %v834 = vsel %vm832, %v827, 0.0
        %v835 = vsel %vm833, %v828, 0.0
        %v836 = vadd.f32 %v834, %v835
        %v837 = vrot.slane %v836, 4
        %v838 = vadd.f32 %v836, %v837
        %v839 = vrot.slane %v838, 2
        %v840 = vadd.f32 %v838, %v839
        %v841 = vrot.slane %v840, 1
        %v842 = vadd.f32 %v840, %v841
        %v843 = vmul.f32 %v842, 0.083333336
        %v844 = vld [vmem:[%s185 + $0x48] sm:$0x1]
        %v845 = vadd.f32 %v843, %v844
        %v846 = vld [vmem:[#allocation6 + $0x200] sm:$0xff]
        %v847 = vld [vmem:[#allocation6 + $0x208] sm:$0xff]
        %v848 = vld [vmem:[#allocation6 + $0x210] sm:$0xff]
        %v849 = vld [vmem:[#allocation6 + $0x218] sm:$0xff]
        %v850 = vld [vmem:[#allocation6 + $0x220] sm:$0xff]
        %v851 = vld [vmem:[#allocation6 + $0x228] sm:$0xff]
        %v852 = vld [vmem:[#allocation6 + $0x230] sm:$0xff]
        %v853 = vld [vmem:[#allocation6 + $0x238] sm:$0xff]
        %v854 = vld [vmem:[#allocation6 + $0x240] sm:$0xff]
        %v855 = vld [vmem:[#allocation6 + $0x248] sm:$0xff]
        %v856 = vld [vmem:[#allocation6 + $0x250] sm:$0xff]
        %v857 = vld [vmem:[#allocation6 + $0x258] sm:$0xff]
        %v858 = vld [vmem:[#allocation6 + $0x260] sm:$0xff]
        %v859 = vld [vmem:[#allocation6 + $0x268] sm:$0xff]
        %v860 = vld [vmem:[#allocation6 + $0x270] sm:$0xff]
        %v861 = vld [vmem:[#allocation6 + $0x278] sm:$0xff]
        %v862 = vld [vmem:[#allocation8 + $0x4] sm:$0x1]
        %863 = vmatprep.subr.mxu0 0.0
        %864 = vmatpush1.msra.mxu0 %v846
        %865 = vmatprep.subr.mxu0 0.0
        %866 = vmatpush1.msra.mxu0 %v847
        %867 = vmatprep.subr.mxu0 0.0
        %868 = vmatpush1.msra.mxu0 %v848
        %869 = vmatprep.subr.mxu0 0.0
        %870 = vmatpush1.msra.mxu0 %v849
        %871 = vmatprep.subr.mxu0 0.0
        %872 = vmatpush1.msra.mxu0 %v850
        %873 = vmatprep.subr.mxu0 0.0
        %874 = vmatpush1.msra.mxu0 %v851
        %875 = vmatprep.subr.mxu0 0.0
        %876 = vmatpush1.msra.mxu0 %v852
        %877 = vmatprep.subr.mxu0 0.0
        %878 = vmatpush1.msra.mxu0 %v853
        %879 = vmatprep.subr.mxu0 0.0
        %880 = vmatpush1.msra.mxu0 %v854
        %881 = vmatprep.subr.mxu0 0.0
        %882 = vmatpush1.msra.mxu0 %v855
        %883 = vmatprep.subr.mxu0 0.0
        %884 = vmatpush1.msra.mxu0 %v856
        %885 = vmatprep.subr.mxu0 0.0
        %886 = vmatpush1.msra.mxu0 %v857
        %887 = vmatprep.subr.mxu0 0.0
        %888 = vmatpush1.msra.mxu0 %v858
        %889 = vmatprep.subr.mxu0 0.0
        %890 = vmatpush1.msra.mxu0 %v859
        %891 = vmatprep.subr.mxu0 0.0
        %892 = vmatpush1.msra.mxu0 %v860
        %893 = vmatprep.subr.mxu0 0.0
        %894 = vmatpush1.msra.mxu0 %v861
        %895 = vmatprep.subr.mxu0 0.0
        %896 = vmatpush1.msra.mxu0 0.0
        %897 = vmatprep.subr.mxu0 0.0
        %898 = vmatpush1.msra.mxu0 0.0
        %899 = vmatprep.subr.mxu0 0.0
        %900 = vmatpush1.msra.mxu0 0.0
        %901 = vmatprep.subr.mxu0 0.0
        %902 = vmatpush1.msra.mxu0 0.0
        %903 = vmatprep.subr.mxu0 0.0
        %904 = vmatpush1.msra.mxu0 0.0
        %905 = vmatprep.subr.mxu0 0.0
        %906 = vmatpush1.msra.mxu0 0.0
        %907 = vmatprep.subr.mxu0 0.0
        %908 = vmatpush1.msra.mxu0 0.0
        %909 = vmatprep.subr.mxu0 0.0
        %910 = vmatpush1.msra.mxu0 0.0
        %911 = vmatprep.subr.mxu0 0.0
        %912 = vmatpush1.msra.mxu0 0.0
        %913 = vmatprep.subr.mxu0 0.0
        %914 = vmatpush1.msra.mxu0 0.0
        %915 = vmatprep.subr.mxu0 0.0
        %916 = vmatpush1.msra.mxu0 0.0
        %917 = vmatprep.subr.mxu0 0.0
        %918 = vmatpush1.msra.mxu0 0.0
        %919 = vmatprep.subr.mxu0 0.0
        %920 = vmatpush1.msra.mxu0 0.0
        %921 = vmatprep.subr.mxu0 0.0
        %922 = vmatpush1.msra.mxu0 0.0
        %923 = vmatprep.subr.mxu0 0.0
        %924 = vmatpush1.msra.mxu0 0.0
        %925 = vmatprep.subr.mxu0 0.0
        %926 = vmatpush1.msra.mxu0 0.0
        %927 = vmatprep.mubr.f32.mxu0 0.0
        %928 = vmatmul.mubr.f32.gmra.mrb[0].mxu0 %v845
        %v929 = vpop.f32.mrb[0].mxu0
        %v930 = vadd.f32 %v862, %v929
        %v931 = vpop.f32.mrb[0].mxu0
        %932 = vdwg.mxu0
        %v933 = vmax.f32 %v930, 0.0
        %v934 = vld [vmem:[#allocation6 + $0x280] sm:$0xff]
        %v935 = vld [vmem:[#allocation6 + $0x288] sm:$0xff]
        %v936 = vld [vmem:[#allocation6 + $0x290] sm:$0xff]
        %v937 = vld [vmem:[#allocation6 + $0x298] sm:$0xff]
        %v938 = vld [vmem:[#allocation6 + $0x2a0] sm:$0xff]
        %v939 = vld [vmem:[#allocation6 + $0x2a8] sm:$0xff]
        %v940 = vld [vmem:[#allocation6 + $0x2b0] sm:$0xff]
        %v941 = vld [vmem:[#allocation6 + $0x2b8] sm:$0xff]
        %v942 = vld [vmem:[#allocation6 + $0x2c0] sm:$0xff]
        %v943 = vld [vmem:[#allocation6 + $0x2c8] sm:$0xff]
        %v944 = vld [vmem:[#allocation6 + $0x2d0] sm:$0xff]
        %v945 = vld [vmem:[#allocation6 + $0x2d8] sm:$0xff]
        %v946 = vld [vmem:[#allocation6 + $0x2e0] sm:$0xff]
        %v947 = vld [vmem:[#allocation6 + $0x2e8] sm:$0xff]
        %v948 = vld [vmem:[#allocation6 + $0x2f0] sm:$0xff]
        %v949 = vld [vmem:[#allocation6 + $0x2f8] sm:$0xff]
        %v950 = vld [vmem:[#allocation8 + $0x5] sm:$0x1]
        %951 = vmatprep.subr.mxu0 0.0
        %952 = vmatpush1.msra.mxu0 %v934
        %953 = vmatprep.subr.mxu0 0.0
        %954 = vmatpush1.msra.mxu0 %v935
        %955 = vmatprep.subr.mxu0 0.0
        %956 = vmatpush1.msra.mxu0 %v936
        %957 = vmatprep.subr.mxu0 0.0
        %958 = vmatpush1.msra.mxu0 %v937
        %959 = vmatprep.subr.mxu0 0.0
        %960 = vmatpush1.msra.mxu0 %v938
        %961 = vmatprep.subr.mxu0 0.0
        %962 = vmatpush1.msra.mxu0 %v939
        %963 = vmatprep.subr.mxu0 0.0
        %964 = vmatpush1.msra.mxu0 %v940
        %965 = vmatprep.subr.mxu0 0.0
        %966 = vmatpush1.msra.mxu0 %v941
        %967 = vmatprep.subr.mxu0 0.0
        %968 = vmatpush1.msra.mxu0 %v942
        %969 = vmatprep.subr.mxu0 0.0
        %970 = vmatpush1.msra.mxu0 %v943
        %971 = vmatprep.subr.mxu0 0.0
        %972 = vmatpush1.msra.mxu0 %v944
        %973 = vmatprep.subr.mxu0 0.0
        %974 = vmatpush1.msra.mxu0 %v945
        %975 = vmatprep.subr.mxu0 0.0
        %976 = vmatpush1.msra.mxu0 %v946
        %977 = vmatprep.subr.mxu0 0.0
        %978 = vmatpush1.msra.mxu0 %v947
        %979 = vmatprep.subr.mxu0 0.0
        %980 = vmatpush1.msra.mxu0 %v948
        %981 = vmatprep.subr.mxu0 0.0
        %982 = vmatpush1.msra.mxu0 %v949
        %983 = vmatprep.subr.mxu0 0.0
        %984 = vmatpush1.msra.mxu0 0.0
        %985 = vmatprep.subr.mxu0 0.0
        %986 = vmatpush1.msra.mxu0 0.0
        %987 = vmatprep.subr.mxu0 0.0
        %988 = vmatpush1.msra.mxu0 0.0
        %989 = vmatprep.subr.mxu0 0.0
        %990 = vmatpush1.msra.mxu0 0.0
        %991 = vmatprep.subr.mxu0 0.0
        %992 = vmatpush1.msra.mxu0 0.0
        %993 = vmatprep.subr.mxu0 0.0
        %994 = vmatpush1.msra.mxu0 0.0
        %995 = vmatprep.subr.mxu0 0.0
        %996 = vmatpush1.msra.mxu0 0.0
        %997 = vmatprep.subr.mxu0 0.0
        %998 = vmatpush1.msra.mxu0 0.0
        %999 = vmatprep.subr.mxu0 0.0
        %1000 = vmatpush1.msra.mxu0 0.0
        %1001 = vmatprep.subr.mxu0 0.0
        %1002 = vmatpush1.msra.mxu0 0.0
        %1003 = vmatprep.subr.mxu0 0.0
        %1004 = vmatpush1.msra.mxu0 0.0
        %1005 = vmatprep.subr.mxu0 0.0
        %1006 = vmatpush1.msra.mxu0 0.0
        %1007 = vmatprep.subr.mxu0 0.0
        %1008 = vmatpush1.msra.mxu0 0.0
        %1009 = vmatprep.subr.mxu0 0.0
        %1010 = vmatpush1.msra.mxu0 0.0
        %1011 = vmatprep.subr.mxu0 0.0
        %1012 = vmatpush1.msra.mxu0 0.0
        %1013 = vmatprep.subr.mxu0 0.0
        %1014 = vmatpush1.msra.mxu0 0.0
        %1015 = vmatprep.mubr.f32.mxu0 0.0
        %1016 = vmatmul.mubr.f32.gmra.mrb[0].mxu0 %v933
        %v1017 = vpop.f32.mrb[0].mxu0
        %v1018 = vadd.f32 %v950, %v1017
        %v1019 = vpop.f32.mrb[0].mxu0
        %1020 = vdwg.mxu0
        %v1021 = vmax.f32 %v1018, 0.0
        %v1022 = vld [vmem:[#allocation8 + $0x6] sm:$0x1]
        %v1023 = vmul.f32 %v1021, %v1022
        %vm1024 = vcmask 1040384
        %v1025 = vsel %vm1024, %v1023, 0.0
        %1026 = vadd.xlane.f32.xlu0 %v1025
        %v1027 = vpop.xlane.xlu0 %1026
        %v1028 = vld [vmem:[#allocation8 + $0x7] sm:$0x1]
        %v1029 = vadd.f32 %v1027, %v1028
        %v1030 = vlaneseq
        %v1031 = vshrl.u32 %v1030, 7
        %v1032 = vsub.s32 0, %v1031
        %v1033 = vrot.slane %v1029, %v1032
        %1034 = vst [vmem:[%s215] sm:$0xff] %v1033
        %s1035 = sand.u32 %s97, 1
        %s1036 = scalar_lea.sflag [#allocation5], %s1035
        %s1037 = sand.u32 %s97, 1
        %s1038 = smul.addr %s1037, 8
        %s1039 = scalar_lea.vmem [#allocation9], %s1038
        // Predicated region
        $region45: #{tpu_custom_call.1} parent=31 // pred_check
          %p1040 = pneg %p107
        $region46: #{tpu_custom_call.1} parent=31 // pred_check_branch
          %1042 = sbr.rel (%p1040) target = $region48
        $region47: #{tpu_custom_call.1} parent=31 // pred_region
          %s1044 = ssub.s32 128, 128
          %1045 = vsyncadd %s1036, %s1044
          %s1046 = smul.addr %s21, 128
          %s1047 = scalar_lea.hbm %s3, %s1046
          %s1049 = sshll.u32 %s1039, 4
          %s1050 = int_to_ptr.vmem [resolvable:$true] %s1049
          %1052 = dma.vmem_to_hbm [thread:$0]  %s1050, 128, %s1047, %s1036
        $region48: #{tpu_custom_call.1} parent=31 // pred_fallthru
          _
      $region32: #{tpu_custom_call.1} parent=5 // pred_fallthru
        _
      %p1053 = scmp.le.s32.totalorder 2, %s16
      // Predicated region
      $region49: #{tpu_custom_call.1} parent=5 // pred_check
        %p1054 = pneg %p1053
      $region50: #{tpu_custom_call.1} parent=5 // pred_check_branch
        %1056 = sbr.rel (%p1054) target = $region52
      $region51: #{tpu_custom_call.1} parent=5 // pred_region
        %s1057 = ssub.s32 %s16, 2
        // Predicated region
        $region53: #{tpu_custom_call.1} parent=51 // pred_check
          %p1058 = pneg %p113
        $region54: #{tpu_custom_call.1} parent=51 // pred_check_branch
          %1060 = sbr.rel (%p1058) target = $region56
        $region55: #{tpu_custom_call.1} parent=51 // pred_region
          %s1061 = sand.u32 %s98, 1
          %s1062 = scalar_lea.sflag [#allocation5], %s1061
          %s1063 = sand.u32 %s98, 1
          %s1064 = smul.addr %s1063, 8
          %s1065 = scalar_lea.vmem [#allocation9], %s1064
          %1066 = dma.done %s1062, 128
        $region56: #{tpu_custom_call.1} parent=51 // pred_fallthru
          _
      $region52: #{tpu_custom_call.1} parent=5 // pred_fallthru
        _
    $region6: #{tpu_custom_call.1} parent=1 // loop_footer
      %s20 = sadd.s32 1, %s16
    $region7: #{tpu_custom_call.1} parent=1 // loop_footer_branch
      %15 = sbr.rel target = $region3
    $region8: #{tpu_custom_call.1} parent=1 // loop_exit
      _
    %1067 = vsyncpa [#allocation4], 1
    %s1068 = scalar_lea.sflag [#allocation4], 1
    %1069 = vsyncpa %s1068, 1
    %1070 = vsyncpa [#allocation7], 1
    %1071 = vsyncpa [#allocation5], 1
    %s1072 = scalar_lea.sflag [#allocation5], 1
    %1073 = vsyncpa %s1072, 1

</llo_original>
